<compile_context>
chip_gen: v7x
topology: tpu7x:2x2x1
jax: 0.10.0
libtpu: 0.0.40
codegen_flags: <defaults>
</compile_context>

<pallas_src>
import functools
import re

import jax
import jax.numpy as jnp
from jax.experimental import pallas as pl
from jax.experimental.pallas import tpu as pltpu


def _gelu_tanh(x):
    # tanh-approx GELU (tanh goes to the EUP slot).
    # TODO(synk): PyTorch nn.GELU() defaults to the exact erf form; this matches
    # nn.GELU(approximate='tanh') and differs by <1e-3 from the erf version.
    c = 0.7978845608028654  # sqrt(2/pi)
    return 0.5 * x * (1.0 + jnp.tanh(c * (x + 0.044715 * x * x * x)))


def _tpu_generation():
    """Best-effort TPU generation (6 -> v6e, 7 -> v7x, ...); 0 if unknown."""
    try:
        kind = jax.devices()[0].device_kind.lower()
    except Exception:
        return 0
    m = re.search(r"v(\d+)", kind)
    return int(m.group(1)) if m else 0


def residual_mlp_kernel(x_ref, w1_ref, b1_ref, w2_ref, b2_ref, o_ref, acc_ref,
                        *, n_chunks, th, gelu_dtype):
    # x_ref: (TM, D)   w1_ref: (D, H)   b1_ref: (1, H)
    # w2_ref: (H, D)   b2_ref: (1, D)   o_ref: (TM, D)
    # acc_ref: (TM, D) f32 accumulator (VMEM scratch).
    x = x_ref[...]  # native dtype (bf16 on the fast path) — residual source

    # Accumulator starts at residual + output bias, both in f32.
    acc_ref[...] = x.astype(jnp.float32) + b2_ref[...].astype(jnp.float32)

    # H-chunked fused MLP: the (TM, H) intermediate never hits VMEM scratch.
    for c in range(n_chunks):
        lo, hi = c * th, (c + 1) * th
        # Linear 1 chunk: native-dtype operands on the MXU, f32 accumulation.
        h = jnp.dot(x, w1_ref[:, lo:hi], preferred_element_type=jnp.float32)
        # Bias add + GELU in gelu_dtype (bf16 on v6e/v7x, f32 on v5e/older).
        h = h.astype(gelu_dtype) + b1_ref[:, lo:hi].astype(gelu_dtype)
        g = _gelu_tanh(h)
        # Linear 2 chunk, accumulated in f32 while the GELU output is still hot.
        acc_ref[...] += jnp.dot(g.astype(w2_ref.dtype), w2_ref[lo:hi, :],
                                preferred_element_type=jnp.float32)

    # ResidualBlock semantics: out = fn(x) + x (residual already folded in).
    o_ref[...] = acc_ref[...].astype(o_ref.dtype)


def _pick_h_chunk(H, target=512):
    """Largest multiple of 128 <= target that divides H; fall back to H."""
    if H <= target:
        return H
    for th in range(target, 127, -128):
        if th % 128 == 0 and H % th == 0:
            return th
    return H


def residual_block(x, w1, b1, w2, b2, *, block_tokens=None, h_chunk=None,
                   donate_x=False):
    """x: (B, N, D) -> (B, N, D);  out = MLP(x) + x, fused in one Pallas kernel."""
    B, N, D = x.shape
    H = w1.shape[1]
    T = B * N
    gen = _tpu_generation()

    # Token tile: 512 on v6e/v7x, 256 otherwise (v5e gains nothing from more).
    if block_tokens is None:
        block_tokens = 512 if gen >= 6 else 256
    tm = min(block_tokens, T)
    tm = max(8, (tm // 8) * 8)
    n_tiles = pl.cdiv(T, tm)

    th = h_chunk if h_chunk is not None else _pick_h_chunk(H)
    if H % th != 0:
        th = H
    n_chunks = H // th

    # GELU arithmetic dtype: bf16 on v6e/v7x (bf16 VPU/EUP), f32 elsewhere.
    gelu_dtype = x.dtype if (gen >= 6 and x.dtype == jnp.bfloat16) else jnp.float32

    x2 = x.reshape(T, D)
    b1_2 = b1.reshape(1, H)
    b2_2 = b2.reshape(1, D)

    kernel = functools.partial(residual_mlp_kernel, n_chunks=n_chunks, th=th,
                               gelu_dtype=gelu_dtype)

    act_bytes = jnp.dtype(x.dtype).itemsize
    w_bytes = jnp.dtype(w1.dtype).itemsize
    cost = pl.CostEstimate(
        flops=4 * T * D * H,                                  # two GEMMs
        transcendentals=T * H,                                # one tanh / hidden elem
        bytes_accessed=2 * T * D * act_bytes                  # x read + out write
        + (2 * D * H + H + D) * w_bytes,                      # weights + biases (once)
    )

    # VMEM budget: resident weights (x2 headroom in case single-buffering is
    # unavailable), double-buffered x/out tiles, f32 accumulator, + slack.
    weight_vmem = (2 * D * H + H + D) * w_bytes
    tile_vmem = 2 * 2 * tm * D * act_bytes + tm * D * 4
    vmem_limit = int(min(max((2 * weight_vmem + tile_vmem) * 1.25 + (4 << 20),
                             16 << 20), 96 << 20))

    # v7x: explicitly shard the token axis across the 2 TensorCores.
    token_sem = (getattr(pltpu, "CORE_PARALLEL", pltpu.PARALLEL)
                 if gen >= 7 else pltpu.PARALLEL)

    def build_and_run(single_buffer_resident):
        res_kw = ({"pipeline_mode": pl.Buffered(1)}
                  if single_buffer_resident else {})
        in_specs = [
            pl.BlockSpec((tm, D), lambda i: (i, 0)),           # x: streamed/pipelined
            pl.BlockSpec((D, H), lambda i: (0, 0), **res_kw),  # W1: resident
            pl.BlockSpec((1, H), lambda i: (0, 0), **res_kw),  # b1: resident
            pl.BlockSpec((H, D), lambda i: (0, 0), **res_kw),  # W2: resident
            pl.BlockSpec((1, D), lambda i: (0, 0), **res_kw),  # b2: resident
        ]
        return pl.pallas_call(
            kernel,
            out_shape=jax.ShapeDtypeStruct((T, D), x.dtype),
            grid=(n_tiles,),
            in_specs=in_specs,
            out_specs=pl.BlockSpec((tm, D), lambda i: (i, 0)),
            scratch_shapes=[pltpu.VMEM((tm, D), jnp.float32)],  # f32 accumulator
            compiler_params=pltpu.CompilerParams(
                dimension_semantics=(token_sem,),
                vmem_limit_bytes=vmem_limit,
            ),
            cost_estimate=cost,
            input_output_aliases=({0: 0} if donate_x else {}),
        )(x2, w1, b1_2, w2, b2_2)

    try:
        out2 = build_and_run(True)
    except Exception:
        # Fallback if this jax build rejects pipeline_mode=pl.Buffered(1) on the
        # constant-index (resident) operands; semantics are identical.
        out2 = build_and_run(False)

    return out2.reshape(B, N, D)


def reference(x, w1, b1, w2, b2):
    xf = x.astype(jnp.float32)
    h = _gelu_tanh(xf @ w1.astype(jnp.float32) + b1.astype(jnp.float32))
    y = h @ w2.astype(jnp.float32) + b2.astype(jnp.float32)
    return (y + xf).astype(x.dtype)


if __name__ == "__main__":
    # Small but lane-dense ViT-ish shapes: batch=2, 128 tokens, D=128, H=256.
    B, N, D, H = 2, 128, 128, 256

    key = jax.random.PRNGKey(0)
    kx, k1, k2, k3, k4 = jax.random.split(key, 5)

    dt = jnp.bfloat16  # bf16 operands = MXU fast path on all generations
    x = jax.random.normal(kx, (B, N, D), dtype=jnp.float32).astype(dt)
    w1 = (jax.random.normal(k1, (D, H), dtype=jnp.float32) * 0.02).astype(dt)
    b1 = (jax.random.normal(k2, (H,), dtype=jnp.float32) * 0.02).astype(dt)
    w2 = (jax.random.normal(k3, (H, D), dtype=jnp.float32) * 0.02).astype(dt)
    b2 = (jax.random.normal(k4, (D,), dtype=jnp.float32) * 0.02).astype(dt)

    # block_tokens=64 -> 4 token tiles; h_chunk=128 -> 2 accumulated H chunks.
    out = residual_block(x, w1, b1, w2, b2, block_tokens=64, h_chunk=128)
    out = jax.block_until_ready(out)

    ref = reference(x, w1, b1, w2, b2)
    assert out.shape == x.shape and out.dtype == x.dtype
    ok = jnp.allclose(out.astype(jnp.float32), ref.astype(jnp.float32),
                      atol=2e-2, rtol=2e-2)
    assert bool(ok), "mismatch vs reference"

    # Ragged token count (T % tm != 0): padded rows are masked on writeback.
    xr = x[:1, :50]
    out_r = jax.block_until_ready(
        residual_block(xr, w1, b1, w2, b2, block_tokens=32))
    ref_r = reference(xr, w1, b1, w2, b2)
    ok_r = jnp.allclose(out_r.astype(jnp.float32), ref_r.astype(jnp.float32),
                        atol=2e-2, rtol=2e-2)
    assert bool(ok_r), "mismatch vs reference (ragged T)"

    print("KERNEL_OK")
</pallas_src>

<mosaic_0001>
module attributes {stable_mosaic.version = 11 : i64} {
  func.func @residual_mlp_kernel(%arg0: i32, %arg1: memref<64x128xbf16, #tpu.memory_space<vmem>>, %arg2: memref<128x256xbf16, #tpu.memory_space<vmem>>, %arg3: memref<1x256xbf16, #tpu.memory_space<vmem>>, %arg4: memref<256x128xbf16, #tpu.memory_space<vmem>>, %arg5: memref<1x128xbf16, #tpu.memory_space<vmem>>, %arg6: memref<64x128xbf16, #tpu.memory_space<vmem>>, %arg7: memref<64x128xf32, #tpu.memory_space<vmem>>) attributes {dimension_semantics = [#tpu.dimension_semantics<parallel>], iteration_bounds = array<i64: 4>, scalar_prefetch = 0 : i64, scratch_operands = 1 : i64, tpu.core_type = #tpu.core_type<tc>, window_params = [{transform_indices = @transform_0, window_bounds = array<i64: 64, 128>}, {pipeline_mode = #tpu.pipeline_mode<synchronous>, transform_indices = @transform_1, window_bounds = array<i64: 128, 256>}, {pipeline_mode = #tpu.pipeline_mode<synchronous>, transform_indices = @transform_2, window_bounds = array<i64: 1, 256>}, {pipeline_mode = #tpu.pipeline_mode<synchronous>, transform_indices = @transform_3, window_bounds = array<i64: 256, 128>}, {pipeline_mode = #tpu.pipeline_mode<synchronous>, transform_indices = @transform_4, window_bounds = array<i64: 1, 128>}, {transform_indices = @transform_5, window_bounds = array<i64: 64, 128>}]} {
    %c0 = arith.constant 0 : index
    %c0_0 = arith.constant 0 : index
    %0 = vector.load %arg1[%c0, %c0_0] : memref<64x128xbf16, #tpu.memory_space<vmem>>, vector<64x128xbf16>
    %1 = arith.extf %0 : vector<64x128xbf16> to vector<64x128xf32>
    %c0_1 = arith.constant 0 : index
    %c0_2 = arith.constant 0 : index
    %2 = vector.load %arg5[%c0_1, %c0_2] : memref<1x128xbf16, #tpu.memory_space<vmem>>, vector<1x128xbf16>
    %3 = arith.extf %2 : vector<1x128xbf16> to vector<1x128xf32>
    %4 = vector.broadcast %3 : vector<1x128xf32> to vector<64x128xf32>
    %5 = arith.addf %1, %4 : vector<64x128xf32>
    %c0_3 = arith.constant 0 : index
    %c0_4 = arith.constant 0 : index
    %6 = vector.load %arg7[%c0_3, %c0_4] : memref<64x128xf32, #tpu.memory_space<vmem>>, vector<64x128xf32>
    tpu.vector_store %arg7[%c0_3, %c0_4], %5 {strides = array<i32>} : memref<64x128xf32, #tpu.memory_space<vmem>>, vector<64x128xf32>,
    %c0_5 = arith.constant 0 : index
    %c0_6 = arith.constant 0 : index
    %7 = vector.load %arg2[%c0_5, %c0_6] : memref<128x256xbf16, #tpu.memory_space<vmem>>, vector<128x128xbf16>
    %cst = arith.constant dense<0.000000e+00> : vector<64x128xf32>
    %8 = tpu.matmul %0, %7, %cst {dimension_numbers = #tpu.dot_dimension_numbers<[1], [0], [0], [1], [0, 0, 1, 1], [], []>} : vector<64x128xbf16>, vector<128x128xbf16>, vector<64x128xf32> -> vector<64x128xf32>
    %c0_7 = arith.constant 0 : index
    %c0_8 = arith.constant 0 : index
    %9 = vector.load %arg3[%c0_7, %c0_8] : memref<1x256xbf16, #tpu.memory_space<vmem>>, vector<1x128xbf16>
    %10 = arith.extf %9 : vector<1x128xbf16> to vector<1x128xf32>
    %11 = vector.broadcast %10 : vector<1x128xf32> to vector<64x128xf32>
    %12 = arith.addf %8, %11 : vector<64x128xf32>
    %cst_9 = arith.constant 5.000000e-01 : f32
    %13 = vector.broadcast %cst_9 : f32 to vector<64x128xf32>
    %14 = arith.mulf %13, %12 : vector<64x128xf32>
    %cst_10 = arith.constant 4.471500e-02 : f32
    %15 = vector.broadcast %cst_10 : f32 to vector<64x128xf32>
    %16 = arith.mulf %15, %12 : vector<64x128xf32>
    %17 = arith.mulf %16, %12 : vector<64x128xf32>
    %18 = arith.mulf %17, %12 : vector<64x128xf32>
    %19 = arith.addf %12, %18 : vector<64x128xf32>
    %cst_11 = arith.constant 0.797884583 : f32
    %20 = vector.broadcast %cst_11 : f32 to vector<64x128xf32>
    %21 = arith.mulf %20, %19 : vector<64x128xf32>
    %22 = math.tanh %21 : vector<64x128xf32>
    %cst_12 = arith.constant 1.000000e+00 : f32
    %23 = vector.broadcast %cst_12 : f32 to vector<64x128xf32>
    %24 = arith.addf %23, %22 : vector<64x128xf32>
    %25 = arith.mulf %14, %24 : vector<64x128xf32>
    %c0_13 = arith.constant 0 : index
    %c0_14 = arith.constant 0 : index
    %26 = vector.load %arg7[%c0_13, %c0_14] : memref<64x128xf32, #tpu.memory_space<vmem>>, vector<64x128xf32>
    %27 = arith.truncf %25 : vector<64x128xf32> to vector<64x128xbf16>
    %c0_15 = arith.constant 0 : index
    %c0_16 = arith.constant 0 : index
    %28 = vector.load %arg4[%c0_15, %c0_16] : memref<256x128xbf16, #tpu.memory_space<vmem>>, vector<128x128xbf16>
    %cst_17 = arith.constant dense<0.000000e+00> : vector<64x128xf32>
    %29 = tpu.matmul %27, %28, %cst_17 {dimension_numbers = #tpu.dot_dimension_numbers<[1], [0], [0], [1], [0, 0, 1, 1], [], []>} : vector<64x128xbf16>, vector<128x128xbf16>, vector<64x128xf32> -> vector<64x128xf32>
    %30 = arith.addf %26, %29 : vector<64x128xf32>
    %c0_18 = arith.constant 0 : index
    %c0_19 = arith.constant 0 : index
    %31 = vector.load %arg7[%c0_18, %c0_19] : memref<64x128xf32, #tpu.memory_space<vmem>>, vector<64x128xf32>
    tpu.vector_store %arg7[%c0_18, %c0_19], %30 {strides = array<i32>} : memref<64x128xf32, #tpu.memory_space<vmem>>, vector<64x128xf32>,
    %c0_20 = arith.constant 0 : index
    %c128 = arith.constant 128 : index
    %32 = vector.load %arg2[%c0_20, %c128] : memref<128x256xbf16, #tpu.memory_space<vmem>>, vector<128x128xbf16>
    %cst_21 = arith.constant dense<0.000000e+00> : vector<64x128xf32>
    %33 = tpu.matmul %0, %32, %cst_21 {dimension_numbers = #tpu.dot_dimension_numbers<[1], [0], [0], [1], [0, 0, 1, 1], [], []>} : vector<64x128xbf16>, vector<128x128xbf16>, vector<64x128xf32> -> vector<64x128xf32>
    %c0_22 = arith.constant 0 : index
    %c128_23 = arith.constant 128 : index
    %34 = vector.load %arg3[%c0_22, %c128_23] : memref<1x256xbf16, #tpu.memory_space<vmem>>, vector<1x128xbf16>
    %35 = arith.extf %34 : vector<1x128xbf16> to vector<1x128xf32>
    %36 = vector.broadcast %35 : vector<1x128xf32> to vector<64x128xf32>
    %37 = arith.addf %33, %36 : vector<64x128xf32>
    %cst_24 = arith.constant 5.000000e-01 : f32
    %38 = vector.broadcast %cst_24 : f32 to vector<64x128xf32>
    %39 = arith.mulf %38, %37 : vector<64x128xf32>
    %cst_25 = arith.constant 4.471500e-02 : f32
    %40 = vector.broadcast %cst_25 : f32 to vector<64x128xf32>
    %41 = arith.mulf %40, %37 : vector<64x128xf32>
    %42 = arith.mulf %41, %37 : vector<64x128xf32>
    %43 = arith.mulf %42, %37 : vector<64x128xf32>
    %44 = arith.addf %37, %43 : vector<64x128xf32>
    %cst_26 = arith.constant 0.797884583 : f32
    %45 = vector.broadcast %cst_26 : f32 to vector<64x128xf32>
    %46 = arith.mulf %45, %44 : vector<64x128xf32>
    %47 = math.tanh %46 : vector<64x128xf32>
    %cst_27 = arith.constant 1.000000e+00 : f32
    %48 = vector.broadcast %cst_27 : f32 to vector<64x128xf32>
    %49 = arith.addf %48, %47 : vector<64x128xf32>
    %50 = arith.mulf %39, %49 : vector<64x128xf32>
    %c0_28 = arith.constant 0 : index
    %c0_29 = arith.constant 0 : index
    %51 = vector.load %arg7[%c0_28, %c0_29] : memref<64x128xf32, #tpu.memory_space<vmem>>, vector<64x128xf32>
    %52 = arith.truncf %50 : vector<64x128xf32> to vector<64x128xbf16>
    %c128_30 = arith.constant 128 : index
    %c0_31 = arith.constant 0 : index
    %53 = vector.load %arg4[%c128_30, %c0_31] : memref<256x128xbf16, #tpu.memory_space<vmem>>, vector<128x128xbf16>
    %cst_32 = arith.constant dense<0.000000e+00> : vector<64x128xf32>
    %54 = tpu.matmul %52, %53, %cst_32 {dimension_numbers = #tpu.dot_dimension_numbers<[1], [0], [0], [1], [0, 0, 1, 1], [], []>} : vector<64x128xbf16>, vector<128x128xbf16>, vector<64x128xf32> -> vector<64x128xf32>
    %55 = arith.addf %51, %54 : vector<64x128xf32>
    %c0_33 = arith.constant 0 : index
    %c0_34 = arith.constant 0 : index
    %56 = vector.load %arg7[%c0_33, %c0_34] : memref<64x128xf32, #tpu.memory_space<vmem>>, vector<64x128xf32>
    tpu.vector_store %arg7[%c0_33, %c0_34], %55 {strides = array<i32>} : memref<64x128xf32, #tpu.memory_space<vmem>>, vector<64x128xf32>,
    %c0_35 = arith.constant 0 : index
    %c0_36 = arith.constant 0 : index
    %57 = vector.load %arg7[%c0_35, %c0_36] : memref<64x128xf32, #tpu.memory_space<vmem>>, vector<64x128xf32>
    %58 = arith.truncf %57 : vector<64x128xf32> to vector<64x128xbf16>
    %c0_37 = arith.constant 0 : index
    %c0_38 = arith.constant 0 : index
    %59 = vector.load %arg6[%c0_37, %c0_38] : memref<64x128xbf16, #tpu.memory_space<vmem>>, vector<64x128xbf16>
    tpu.vector_store %arg6[%c0_37, %c0_38], %58 {strides = array<i32>} : memref<64x128xbf16, #tpu.memory_space<vmem>>, vector<64x128xbf16>,
    return
  }
  func.func @transform_0(%arg0: i32) -> (i32, i32) {
    %c0_i32 = arith.constant 0 : i32
    %c0_i32_0 = arith.constant 0 : i32
    return %arg0, %c0_i32 : i32, i32
  }
  func.func @transform_1(%arg0: i32) -> (i32, i32) {
    %c0_i32 = arith.constant 0 : i32
    %c0_i32_0 = arith.constant 0 : i32
    %c0_i32_1 = arith.constant 0 : i32
    return %c0_i32, %c0_i32_0 : i32, i32
  }
  func.func @transform_2(%arg0: i32) -> (i32, i32) {
    %c0_i32 = arith.constant 0 : i32
    %c0_i32_0 = arith.constant 0 : i32
    %c0_i32_1 = arith.constant 0 : i32
    return %c0_i32, %c0_i32_0 : i32, i32
  }
  func.func @transform_3(%arg0: i32) -> (i32, i32) {
    %c0_i32 = arith.constant 0 : i32
    %c0_i32_0 = arith.constant 0 : i32
    %c0_i32_1 = arith.constant 0 : i32
    return %c0_i32, %c0_i32_0 : i32, i32
  }
  func.func @transform_4(%arg0: i32) -> (i32, i32) {
    %c0_i32 = arith.constant 0 : i32
    %c0_i32_0 = arith.constant 0 : i32
    %c0_i32_1 = arith.constant 0 : i32
    return %c0_i32, %c0_i32_0 : i32, i32
  }
  func.func @transform_5(%arg0: i32) -> (i32, i32) {
    %c0_i32 = arith.constant 0 : i32
    %c0_i32_0 = arith.constant 0 : i32
    return %arg0, %c0_i32 : i32, i32
  }
}

module attributes {stable_mosaic.version = 11 : i64} {
  func.func @residual_mlp_kernel(%arg0: i32, %arg1: memref<64x128xbf16, #tpu.memory_space<vmem>>, %arg2: memref<128x256xbf16, #tpu.memory_space<vmem>>, %arg3: memref<1x256xbf16, #tpu.memory_space<vmem>>, %arg4: memref<256x128xbf16, #tpu.memory_space<vmem>>, %arg5: memref<1x128xbf16, #tpu.memory_space<vmem>>, %arg6: memref<64x128xbf16, #tpu.memory_space<vmem>>, %arg7: memref<64x128xf32, #tpu.memory_space<vmem>>) attributes {dimension_semantics = [#tpu.dimension_semantics<parallel>], iteration_bounds = array<i64: 4>, scalar_prefetch = 0 : i64, scratch_operands = 1 : i64, tpu.core_type = #tpu.core_type<tc>, window_params = [{transform_indices = @transform_0, window_bounds = array<i64: 64, 128>}, {pipeline_mode = #tpu.pipeline_mode<synchronous>, transform_indices = @transform_1, window_bounds = array<i64: 128, 256>}, {pipeline_mode = #tpu.pipeline_mode<synchronous>, transform_indices = @transform_2, window_bounds = array<i64: 1, 256>}, {pipeline_mode = #tpu.pipeline_mode<synchronous>, transform_indices = @transform_3, window_bounds = array<i64: 256, 128>}, {pipeline_mode = #tpu.pipeline_mode<synchronous>, transform_indices = @transform_4, window_bounds = array<i64: 1, 128>}, {transform_indices = @transform_5, window_bounds = array<i64: 64, 128>}]} {
    %c0 = arith.constant 0 : index
    %c0_0 = arith.constant 0 : index
    %0 = vector.load %arg1[%c0, %c0_0] : memref<64x128xbf16, #tpu.memory_space<vmem>>, vector<64x128xbf16>
    %1 = arith.extf %0 : vector<64x128xbf16> to vector<64x128xf32>
    %c0_1 = arith.constant 0 : index
    %c0_2 = arith.constant 0 : index
    %2 = vector.load %arg5[%c0_1, %c0_2] : memref<1x128xbf16, #tpu.memory_space<vmem>>, vector<1x128xbf16>
    %3 = arith.extf %2 : vector<1x128xbf16> to vector<1x128xf32>
    %4 = vector.broadcast %3 : vector<1x128xf32> to vector<64x128xf32>
    %5 = arith.addf %1, %4 : vector<64x128xf32>
    %c0_3 = arith.constant 0 : index
    %c0_4 = arith.constant 0 : index
    %6 = vector.load %arg7[%c0_3, %c0_4] : memref<64x128xf32, #tpu.memory_space<vmem>>, vector<64x128xf32>
    tpu.vector_store %arg7[%c0_3, %c0_4], %5 {strides = array<i32>} : memref<64x128xf32, #tpu.memory_space<vmem>>, vector<64x128xf32>,
    %c0_5 = arith.constant 0 : index
    %c0_6 = arith.constant 0 : index
    %7 = vector.load %arg2[%c0_5, %c0_6] : memref<128x256xbf16, #tpu.memory_space<vmem>>, vector<128x128xbf16>
    %cst = arith.constant dense<0.000000e+00> : vector<64x128xf32>
    %8 = tpu.matmul %0, %7, %cst {dimension_numbers = #tpu.dot_dimension_numbers<[1], [0], [0], [1], [0, 0, 1, 1], [], []>} : vector<64x128xbf16>, vector<128x128xbf16>, vector<64x128xf32> -> vector<64x128xf32>
    %c0_7 = arith.constant 0 : index
    %c0_8 = arith.constant 0 : index
    %9 = vector.load %arg3[%c0_7, %c0_8] : memref<1x256xbf16, #tpu.memory_space<vmem>>, vector<1x128xbf16>
    %10 = arith.extf %9 : vector<1x128xbf16> to vector<1x128xf32>
    %11 = vector.broadcast %10 : vector<1x128xf32> to vector<64x128xf32>
    %12 = arith.addf %8, %11 : vector<64x128xf32>
    %cst_9 = arith.constant 5.000000e-01 : f32
    %13 = vector.broadcast %cst_9 : f32 to vector<64x128xf32>
    %14 = arith.mulf %13, %12 : vector<64x128xf32>
    %cst_10 = arith.constant 4.471500e-02 : f32
    %15 = vector.broadcast %cst_10 : f32 to vector<64x128xf32>
    %16 = arith.mulf %15, %12 : vector<64x128xf32>
    %17 = arith.mulf %16, %12 : vector<64x128xf32>
    %18 = arith.mulf %17, %12 : vector<64x128xf32>
    %19 = arith.addf %12, %18 : vector<64x128xf32>
    %cst_11 = arith.constant 0.797884583 : f32
    %20 = vector.broadcast %cst_11 : f32 to vector<64x128xf32>
    %21 = arith.mulf %20, %19 : vector<64x128xf32>
    %22 = math.tanh %21 : vector<64x128xf32>
    %cst_12 = arith.constant 1.000000e+00 : f32
    %23 = vector.broadcast %cst_12 : f32 to vector<64x128xf32>
    %24 = arith.addf %23, %22 : vector<64x128xf32>
    %25 = arith.mulf %14, %24 : vector<64x128xf32>
    %c0_13 = arith.constant 0 : index
    %c0_14 = arith.constant 0 : index
    %26 = vector.load %arg7[%c0_13, %c0_14] : memref<64x128xf32, #tpu.memory_space<vmem>>, vector<64x128xf32>
    %27 = arith.truncf %25 : vector<64x128xf32> to vector<64x128xbf16>
    %c0_15 = arith.constant 0 : index
    %c0_16 = arith.constant 0 : index
    %28 = vector.load %arg4[%c0_15, %c0_16] : memref<256x128xbf16, #tpu.memory_space<vmem>>, vector<128x128xbf16>
    %cst_17 = arith.constant dense<0.000000e+00> : vector<64x128xf32>
    %29 = tpu.matmul %27, %28, %cst_17 {dimension_numbers = #tpu.dot_dimension_numbers<[1], [0], [0], [1], [0, 0, 1, 1], [], []>} : vector<64x128xbf16>, vector<128x128xbf16>, vector<64x128xf32> -> vector<64x128xf32>
    %30 = arith.addf %26, %29 : vector<64x128xf32>
    %c0_18 = arith.constant 0 : index
    %c0_19 = arith.constant 0 : index
    %31 = vector.load %arg7[%c0_18, %c0_19] : memref<64x128xf32, #tpu.memory_space<vmem>>, vector<64x128xf32>
    tpu.vector_store %arg7[%c0_18, %c0_19], %30 {strides = array<i32>} : memref<64x128xf32, #tpu.memory_space<vmem>>, vector<64x128xf32>,
    %c0_20 = arith.constant 0 : index
    %c128 = arith.constant 128 : index
    %32 = vector.load %arg2[%c0_20, %c128] : memref<128x256xbf16, #tpu.memory_space<vmem>>, vector<128x128xbf16>
    %cst_21 = arith.constant dense<0.000000e+00> : vector<64x128xf32>
    %33 = tpu.matmul %0, %32, %cst_21 {dimension_numbers = #tpu.dot_dimension_numbers<[1], [0], [0], [1], [0, 0, 1, 1], [], []>} : vector<64x128xbf16>, vector<128x128xbf16>, vector<64x128xf32> -> vector<64x128xf32>
    %c0_22 = arith.constant 0 : index
    %c128_23 = arith.constant 128 : index
    %34 = vector.load %arg3[%c0_22, %c128_23] : memref<1x256xbf16, #tpu.memory_space<vmem>>, vector<1x128xbf16>
    %35 = arith.extf %34 : vector<1x128xbf16> to vector<1x128xf32>
    %36 = vector.broadcast %35 : vector<1x128xf32> to vector<64x128xf32>
    %37 = arith.addf %33, %36 : vector<64x128xf32>
    %cst_24 = arith.constant 5.000000e-01 : f32
    %38 = vector.broadcast %cst_24 : f32 to vector<64x128xf32>
    %39 = arith.mulf %38, %37 : vector<64x128xf32>
    %cst_25 = arith.constant 4.471500e-02 : f32
    %40 = vector.broadcast %cst_25 : f32 to vector<64x128xf32>
    %41 = arith.mulf %40, %37 : vector<64x128xf32>
    %42 = arith.mulf %41, %37 : vector<64x128xf32>
    %43 = arith.mulf %42, %37 : vector<64x128xf32>
    %44 = arith.addf %37, %43 : vector<64x128xf32>
    %cst_26 = arith.constant 0.797884583 : f32
    %45 = vector.broadcast %cst_26 : f32 to vector<64x128xf32>
    %46 = arith.mulf %45, %44 : vector<64x128xf32>
    %47 = math.tanh %46 : vector<64x128xf32>
    %cst_27 = arith.constant 1.000000e+00 : f32
    %48 = vector.broadcast %cst_27 : f32 to vector<64x128xf32>
    %49 = arith.addf %48, %47 : vector<64x128xf32>
    %50 = arith.mulf %39, %49 : vector<64x128xf32>
    %c0_28 = arith.constant 0 : index
    %c0_29 = arith.constant 0 : index
    %51 = vector.load %arg7[%c0_28, %c0_29] : memref<64x128xf32, #tpu.memory_space<vmem>>, vector<64x128xf32>
    %52 = arith.truncf %50 : vector<64x128xf32> to vector<64x128xbf16>
    %c128_30 = arith.constant 128 : index
    %c0_31 = arith.constant 0 : index
    %53 = vector.load %arg4[%c128_30, %c0_31] : memref<256x128xbf16, #tpu.memory_space<vmem>>, vector<128x128xbf16>
    %cst_32 = arith.constant dense<0.000000e+00> : vector<64x128xf32>
    %54 = tpu.matmul %52, %53, %cst_32 {dimension_numbers = #tpu.dot_dimension_numbers<[1], [0], [0], [1], [0, 0, 1, 1], [], []>} : vector<64x128xbf16>, vector<128x128xbf16>, vector<64x128xf32> -> vector<64x128xf32>
    %55 = arith.addf %51, %54 : vector<64x128xf32>
    %c0_33 = arith.constant 0 : index
    %c0_34 = arith.constant 0 : index
    %56 = vector.load %arg7[%c0_33, %c0_34] : memref<64x128xf32, #tpu.memory_space<vmem>>, vector<64x128xf32>
    tpu.vector_store %arg7[%c0_33, %c0_34], %55 {strides = array<i32>} : memref<64x128xf32, #tpu.memory_space<vmem>>, vector<64x128xf32>,
    %c0_35 = arith.constant 0 : index
    %c0_36 = arith.constant 0 : index
    %57 = vector.load %arg7[%c0_35, %c0_36] : memref<64x128xf32, #tpu.memory_space<vmem>>, vector<64x128xf32>
    %58 = arith.truncf %57 : vector<64x128xf32> to vector<64x128xbf16>
    %c0_37 = arith.constant 0 : index
    %c0_38 = arith.constant 0 : index
    %59 = vector.load %arg6[%c0_37, %c0_38] : memref<64x128xbf16, #tpu.memory_space<vmem>>, vector<64x128xbf16>
    tpu.vector_store %arg6[%c0_37, %c0_38], %58 {strides = array<i32>} : memref<64x128xbf16, #tpu.memory_space<vmem>>, vector<64x128xbf16>,
    return
  }
  func.func @transform_0(%arg0: i32) -> (i32, i32) {
    %c0_i32 = arith.constant 0 : i32
    %c0_i32_0 = arith.constant 0 : i32
    return %arg0, %c0_i32 : i32, i32
  }
  func.func @transform_1(%arg0: i32) -> (i32, i32) {
    %c0_i32 = arith.constant 0 : i32
    %c0_i32_0 = arith.constant 0 : i32
    %c0_i32_1 = arith.constant 0 : i32
    return %c0_i32, %c0_i32_0 : i32, i32
  }
  func.func @transform_2(%arg0: i32) -> (i32, i32) {
    %c0_i32 = arith.constant 0 : i32
    %c0_i32_0 = arith.constant 0 : i32
    %c0_i32_1 = arith.constant 0 : i32
    return %c0_i32, %c0_i32_0 : i32, i32
  }
  func.func @transform_3(%arg0: i32) -> (i32, i32) {
    %c0_i32 = arith.constant 0 : i32
    %c0_i32_0 = arith.constant 0 : i32
    %c0_i32_1 = arith.constant 0 : i32
    return %c0_i32, %c0_i32_0 : i32, i32
  }
  func.func @transform_4(%arg0: i32) -> (i32, i32) {
    %c0_i32 = arith.constant 0 : i32
    %c0_i32_0 = arith.constant 0 : i32
    %c0_i32_1 = arith.constant 0 : i32
    return %c0_i32, %c0_i32_0 : i32, i32
  }
  func.func @transform_5(%arg0: i32) -> (i32, i32) {
    %c0_i32 = arith.constant 0 : i32
    %c0_i32_0 = arith.constant 0 : i32
    return %arg0, %c0_i32 : i32, i32
  }
}

</mosaic_0001>

<llo_original>
// kernel: tpu_custom_call.1
$region0: #{tpu_custom_call.1}
  #allocation0 [shape = 'u32[]', space=smem, size = 0x4, offset = 0x4, fixed_abs, tag = 'smem constant byte address 0x4 - core index']
  #allocation1 [shape = 'u32[144,128]{1,0:T(1,128)}', space=vmem, size = 0x12000, scoped, tag = 'internal scratch']
  #allocation2 [shape = 'f32[64,128]{1,0:T(8,128)}', space=vmem, size = 0x8000, scoped, tag = 'scratch operand']
  %s0 = inlined_call_operand.hbm [shape: bf16[256,128], index: 0, kind: input, shape index: {}]
  %s1 = inlined_call_operand.hbm [shape: bf16[128,256], index: 1, kind: input, shape index: {}]
  %s2 = inlined_call_operand.vmem [shape: bf16[1,256], index: 2, kind: input, shape index: {}]
  %s3 = inlined_call_operand.hbm [shape: bf16[256,128], index: 3, kind: input, shape index: {}]
  %s4 = inlined_call_operand.vmem [shape: bf16[1,128], index: 4, kind: input, shape index: {}]
  %s5 = inlined_call_operand.hbm [shape: bf16[256,128], index: 5, kind: output, shape index: {}]
  %s6 = sld [smem:[#allocation0]]
  $region65: #{tpu_custom_call.1} parent=0
    _
  %s8 = ssub.s32 1, %s6
  %s9 = scalar_select 0, %s8, %s6
  $region1: #{tpu_custom_call.1} parent=0
    #allocation3 [shape = 'u8[32768]{0}', space=vmem, size = 0x8000, scoped, tag = 'input window, operand 0']
    #allocation4 [shape = 's32[2]{0}', space=sflag, size = 0x8, scoped, tag = 'scoped memory for tpu_custom_call.1']
    #allocation5 [shape = 's32[2]{0}', space=sflag, size = 0x8, scoped, tag = 'scoped memory for tpu_custom_call.1']
    #allocation6 [shape = 'u8[65536]{0}', space=vmem, size = 0x10000, scoped, tag = 'input window, operand 1, single buffered']
    #allocation7 [shape = 's32[1]{0}', space=sflag, size = 0x4, scoped, tag = 'scoped memory for tpu_custom_call.1']
    #allocation8 [shape = 'u8[65536]{0}', space=vmem, size = 0x10000, scoped, tag = 'input window, operand 3, single buffered']
    #allocation9 [shape = 'u8[32768]{0}', space=vmem, size = 0x8000, scoped, tag = 'output window, operand 0']
    %10 = vsyncpa [#allocation4], 0
    %s11 = scalar_lea.sflag [#allocation4], 1
    %12 = vsyncpa %s11, 0
    %13 = vsyncpa [#allocation7], 0
    %14 = vsyncpa [#allocation5], 0
    %s15 = scalar_lea.sflag [#allocation5], 1
    %16 = vsyncpa %s15, 0
    loop: start=0, step=1, limit=6
    $region2: #{tpu_custom_call.1} parent=1 // loop_pre_header
      _
    $region3: #{tpu_custom_call.1} parent=1 // loop_header
      %s18 = sphi 0, %s22
      %p19 = scmp.ge.s32.totalorder %s18, 6
      %s28 = sphi 0, %s30
      %s31 = sphi 0, %s28
      %s32 = sphi 0, %s31
      %s48 = sphi 0, %s32
      %s52 = sphi 0, %s52
      %s54 = sphi 0, %s52
      %s55 = sphi 0, %s54
      %s69 = sphi 0, %s55
      %s73 = sphi 0, %s73
      %s75 = sphi 0, %s73
      %s76 = sphi 0, %s75
      %s90 = sphi 0, %s76
      %s94 = sphi 0, %s94
      %s96 = sphi 0, %s94
      %s97 = sphi 0, %s96
      %s111 = sphi 0, %s97
      %s115 = sphi 0, %s115
      %s117 = sphi 0, %s115
      %s118 = sphi 0, %s117
      %s132 = sphi 0, %s118
      %s138 = sphi 0, %s140
      %s141 = sphi 0, %s138
      %s142 = sphi 0, %s141
      %s158 = sphi 0, %s142
    $region4: #{tpu_custom_call.1} parent=1 // loop_header_branch
      %21 = sbr.rel (%p19) target = $region8
    $region5: #{tpu_custom_call.1} parent=1 // loop_body
      %s23 = ssub.s32 %s18, 1
      %s24 = ssub.s32 %s18, 2
      %s25 = sadd.s32 %s18, 1
      %s26 = ssub.s32 %s18, %s25
      %p27 = scmp.eq.s32.totalorder %s26, 0
      %s29 = sadd.s32 %s28, 1
      %s30 = scalar_select %p27, %s28, %s29
      %p33 = pneg %p27
      %p34 = scmp.eq.s32.totalorder %s18, 3
      %p35 = por %p33, %p34
      %p36 = scmp.ne.s32.totalorder %s28, %s31
      %p37 = scmp.eq.s32.totalorder %s18, 0
      %p38 = por %p36, %p37
      %p39 = scmp.ne.s32.totalorder %s28, %s31
      %p40 = scmp.eq.s32.totalorder %s23, 3
      %p41 = por %p39, %p40
      %p42 = scmp.ne.s32.totalorder %s31, %s32
      %p43 = scmp.eq.s32.totalorder %s23, 0
      %p44 = por %p42, %p43
      %p45 = scmp.ne.s32.totalorder %s31, %s32
      %p46 = scmp.eq.s32.totalorder %s24, 3
      %p47 = por %p45, %p46
      %p49 = scmp.ne.s32.totalorder %s32, %s48
      %p50 = scmp.eq.s32.totalorder %s24, 0
      %p51 = por %p49, %p50
      %s53 = sadd.s32 %s52, 1
      %p56 = scmp.eq.s32.totalorder %s18, 3
      %p57 = scmp.ne.s32.totalorder %s52, %s54
      %p58 = scmp.eq.s32.totalorder %s18, 0
      %p59 = por %p57, %p58
      %p60 = scmp.ne.s32.totalorder %s52, %s54
      %p61 = scmp.eq.s32.totalorder %s23, 3
      %p62 = por %p60, %p61
      %p63 = scmp.ne.s32.totalorder %s54, %s55
      %p64 = scmp.eq.s32.totalorder %s23, 0
      %p65 = por %p63, %p64
      %p66 = scmp.ne.s32.totalorder %s54, %s55
      %p67 = scmp.eq.s32.totalorder %s24, 3
      %p68 = por %p66, %p67
      %p70 = scmp.ne.s32.totalorder %s55, %s69
      %p71 = scmp.eq.s32.totalorder %s24, 0
      %p72 = por %p70, %p71
      %s74 = sadd.s32 %s73, 1
      %p77 = scmp.eq.s32.totalorder %s18, 3
      %p78 = scmp.ne.s32.totalorder %s73, %s75
      %p79 = scmp.eq.s32.totalorder %s18, 0
      %p80 = por %p78, %p79
      %p81 = scmp.ne.s32.totalorder %s73, %s75
      %p82 = scmp.eq.s32.totalorder %s23, 3
      %p83 = por %p81, %p82
      %p84 = scmp.ne.s32.totalorder %s75, %s76
      %p85 = scmp.eq.s32.totalorder %s23, 0
      %p86 = por %p84, %p85
      %p87 = scmp.ne.s32.totalorder %s75, %s76
      %p88 = scmp.eq.s32.totalorder %s24, 3
      %p89 = por %p87, %p88
      %p91 = scmp.ne.s32.totalorder %s76, %s90
      %p92 = scmp.eq.s32.totalorder %s24, 0
      %p93 = por %p91, %p92
      %s95 = sadd.s32 %s94, 1
      %p98 = scmp.eq.s32.totalorder %s18, 3
      %p99 = scmp.ne.s32.totalorder %s94, %s96
      %p100 = scmp.eq.s32.totalorder %s18, 0
      %p101 = por %p99, %p100
      %p102 = scmp.ne.s32.totalorder %s94, %s96
      %p103 = scmp.eq.s32.totalorder %s23, 3
      %p104 = por %p102, %p103
      %p105 = scmp.ne.s32.totalorder %s96, %s97
      %p106 = scmp.eq.s32.totalorder %s23, 0
      %p107 = por %p105, %p106
      %p108 = scmp.ne.s32.totalorder %s96, %s97
      %p109 = scmp.eq.s32.totalorder %s24, 3
      %p110 = por %p108, %p109
      %p112 = scmp.ne.s32.totalorder %s97, %s111
      %p113 = scmp.eq.s32.totalorder %s24, 0
      %p114 = por %p112, %p113
      %s116 = sadd.s32 %s115, 1
      %p119 = scmp.eq.s32.totalorder %s18, 3
      %p120 = scmp.ne.s32.totalorder %s115, %s117
      %p121 = scmp.eq.s32.totalorder %s18, 0
      %p122 = por %p120, %p121
      %p123 = scmp.ne.s32.totalorder %s115, %s117
      %p124 = scmp.eq.s32.totalorder %s23, 3
      %p125 = por %p123, %p124
      %p126 = scmp.ne.s32.totalorder %s117, %s118
      %p127 = scmp.eq.s32.totalorder %s23, 0
      %p128 = por %p126, %p127
      %p129 = scmp.ne.s32.totalorder %s117, %s118
      %p130 = scmp.eq.s32.totalorder %s24, 3
      %p131 = por %p129, %p130
      %p133 = scmp.ne.s32.totalorder %s118, %s132
      %p134 = scmp.eq.s32.totalorder %s24, 0
      %p135 = por %p133, %p134
      %s136 = ssub.s32 %s18, %s25
      %p137 = scmp.eq.s32.totalorder %s136, 0
      %s139 = sadd.s32 %s138, 1
      %s140 = scalar_select %p137, %s138, %s139
      %p143 = pneg %p137
      %p144 = scmp.eq.s32.totalorder %s18, 3
      %p145 = por %p143, %p144
      %p146 = scmp.ne.s32.totalorder %s138, %s141
      %p147 = scmp.eq.s32.totalorder %s18, 0
      %p148 = por %p146, %p147
      %p149 = scmp.ne.s32.totalorder %s138, %s141
      %p150 = scmp.eq.s32.totalorder %s23, 3
      %p151 = por %p149, %p150
      %p152 = scmp.ne.s32.totalorder %s141, %s142
      %p153 = scmp.eq.s32.totalorder %s23, 0
      %p154 = por %p152, %p153
      %p155 = scmp.ne.s32.totalorder %s141, %s142
      %p156 = scmp.eq.s32.totalorder %s24, 3
      %p157 = por %p155, %p156
      %p159 = scmp.ne.s32.totalorder %s142, %s158
      %p160 = scmp.eq.s32.totalorder %s24, 0
      %p161 = por %p159, %p160
      %p162 = scmp.le.s32.totalorder 1, %s18
      %p163 = scmp.lt.s32.totalorder %s18, 5
      %p164 = pnand %p162, %p163
      %p165 = pneg %p164
      // Predicated region
      $region9: #{tpu_custom_call.1} parent=5 // pred_check
        _
      $region10: #{tpu_custom_call.1} parent=5 // pred_check_branch
        %167 = sbr.rel (%p164) target = $region12
      $region11: #{tpu_custom_call.1} parent=5 // pred_region
        %s168 = ssub.s32 %s18, 1
        // Predicated region
        $region13: #{tpu_custom_call.1} parent=11 // pred_check
          %p169 = pneg %p65
        $region14: #{tpu_custom_call.1} parent=11 // pred_check_branch
          %171 = sbr.rel (%p169) target = $region16
        $region15: #{tpu_custom_call.1} parent=11 // pred_region
          %s173 = ssub.s32 2048, 2048
          %174 = vsyncadd [#allocation7], %s173
          %s175 = sshll.u32 [#allocation6], 4
          %s176 = int_to_ptr.vmem [resolvable:$true] %s175
          %181 = dma.hbm_to_vmem [thread:$0]  %s1, 2048, %s176, [#allocation7], 128, 128, 8
        $region16: #{tpu_custom_call.1} parent=11 // pred_fallthru
          _
        // Predicated region
        $region17: #{tpu_custom_call.1} parent=11 // pred_check
          %p182 = pneg %p86
        $region18: #{tpu_custom_call.1} parent=11 // pred_check_branch
          %184 = sbr.rel (%p182) target = $region20
        $region19: #{tpu_custom_call.1} parent=11 // pred_region
          _
        $region20: #{tpu_custom_call.1} parent=11 // pred_fallthru
          _
        // Predicated region
        $region21: #{tpu_custom_call.1} parent=11 // pred_check
          %p185 = pneg %p107
        $region22: #{tpu_custom_call.1} parent=11 // pred_check_branch
          %187 = sbr.rel (%p185) target = $region24
        $region23: #{tpu_custom_call.1} parent=11 // pred_region
          %s189 = ssub.s32 2048, 2048
          %190 = vsyncadd [#allocation7], %s189
          %s191 = sshll.u32 [#allocation8], 4
          %s192 = int_to_ptr.vmem [resolvable:$true] %s191
          %197 = dma.hbm_to_vmem [thread:$0]  %s3, 2048, %s192, [#allocation7], 64, 64, 4
        $region24: #{tpu_custom_call.1} parent=11 // pred_fallthru
          _
        // Predicated region
        $region25: #{tpu_custom_call.1} parent=11 // pred_check
          %p198 = pneg %p128
        $region26: #{tpu_custom_call.1} parent=11 // pred_check_branch
          %200 = sbr.rel (%p198) target = $region28
        $region27: #{tpu_custom_call.1} parent=11 // pred_region
          _
        $region28: #{tpu_custom_call.1} parent=11 // pred_fallthru
          _
      $region12: #{tpu_custom_call.1} parent=5 // pred_fallthru
        _
      %p201 = scmp.lt.s32.totalorder %s18, 4
      // Predicated region
      $region29: #{tpu_custom_call.1} parent=5 // pred_check
        %p202 = pneg %p201
      $region30: #{tpu_custom_call.1} parent=5 // pred_check_branch
        %204 = sbr.rel (%p202) target = $region32
      $region31: #{tpu_custom_call.1} parent=5 // pred_region
        // Predicated region
        $region33: #{tpu_custom_call.1} parent=31 // pred_check
          %p205 = pneg %p38
        $region34: #{tpu_custom_call.1} parent=31 // pred_check_branch
          %207 = sbr.rel (%p205) target = $region36
        $region35: #{tpu_custom_call.1} parent=31 // pred_region
          %s208 = sand.u32 %s28, 1
          %s209 = scalar_lea.sflag [#allocation4], %s208
          %s210 = sand.u32 %s28, 1
          %s211 = smul.addr %s210, 32
          %s212 = scalar_lea.vmem [#allocation3], %s211
          %s213 = smul.u32 8, %s18
          %s215 = ssub.s32 512, 512
          %216 = vsyncadd %s209, %s215
          %s217 = smul.addr %s213, 64
          %s218 = scalar_lea.hbm %s0, %s217
          %s219 = sshll.u32 %s212, 4
          %s220 = int_to_ptr.vmem [resolvable:$true] %s219
          %225 = dma.hbm_to_vmem [thread:$0]  %s218, 512, %s220, %s209, 64, 64, 4
        $region36: #{tpu_custom_call.1} parent=31 // pred_fallthru
          _
      $region32: #{tpu_custom_call.1} parent=5 // pred_fallthru
        _
      %p226 = scmp.le.s32.totalorder 1, %s18
      %p227 = scmp.lt.s32.totalorder %s18, 5
      %p228 = pnand %p226, %p227
      %p229 = pneg %p228
      // Predicated region
      $region37: #{tpu_custom_call.1} parent=5 // pred_check
        _
      $region38: #{tpu_custom_call.1} parent=5 // pred_check_branch
        %231 = sbr.rel (%p228) target = $region40
      $region39: #{tpu_custom_call.1} parent=5 // pred_region
        %s232 = ssub.s32 %s18, 1
        %s233 = sand.u32 %s31, 1
        %s234 = scalar_lea.sflag [#allocation4], %s233
        %s235 = sand.u32 %s31, 1
        %s236 = smul.addr %s235, 32
        %s237 = scalar_lea.vmem [#allocation3], %s236
        // Predicated region
        $region41: #{tpu_custom_call.1} parent=39 // pred_check
          %p238 = pneg %p44
        $region42: #{tpu_custom_call.1} parent=39 // pred_check_branch
          %240 = sbr.rel (%p238) target = $region44
        $region43: #{tpu_custom_call.1} parent=39 // pred_region
          %241 = dma.done %s234, 512
        $region44: #{tpu_custom_call.1} parent=39 // pred_fallthru
          _
        // Predicated region
        $region45: #{tpu_custom_call.1} parent=39 // pred_check
          %p242 = pneg %p65
        $region46: #{tpu_custom_call.1} parent=39 // pred_check_branch
          %244 = sbr.rel (%p242) target = $region48
        $region47: #{tpu_custom_call.1} parent=39 // pred_region
          %245 = dma.done [#allocation7], 2048
        $region48: #{tpu_custom_call.1} parent=39 // pred_fallthru
          _
        // Predicated region
        $region49: #{tpu_custom_call.1} parent=39 // pred_check
          %p246 = pneg %p107
        $region50: #{tpu_custom_call.1} parent=39 // pred_check_branch
          %248 = sbr.rel (%p246) target = $region52
        $region51: #{tpu_custom_call.1} parent=39 // pred_region
          %249 = dma.done [#allocation7], 2048
        $region52: #{tpu_custom_call.1} parent=39 // pred_fallthru
          _
        %s250 = sand.u32 %s31, 1
        %s251 = scalar_lea.sflag [#allocation4], %s250
        %s252 = sand.u32 %s31, 1
        %s253 = smul.addr %s252, 32
        %s254 = scalar_lea.vmem [#allocation3], %s253
        %p255 = pneg %p44
        %p256 = pneg %p41
        %p257 = pneg %p65
        %p258 = pneg %p62
        %p259 = pneg %p86
        %p260 = pneg %p83
        %p261 = pneg %p107
        %p262 = pneg %p104
        %p263 = pneg %p128
        %p264 = pneg %p125
        %p265 = pneg %p154
        %p266 = pneg %p151
        %s267 = sand.u32 %s141, 1
        %s268 = scalar_lea.sflag [#allocation5], %s267
        %s269 = sand.u32 %s141, 1
        %s270 = smul.addr %s269, 32
        %s271 = scalar_lea.vmem [#allocation9], %s270
        %s272 = smul.u32 8, %s23
        %s273 = smul.u32 8, %s23
        %v275 = vld [vmem:[%s237] sm:$0xf]
        %v276 = vld [vmem:[%s237 + $0x4] sm:$0xf]
        %v277 = vld [vmem:[%s237 + $0x8] sm:$0xf]
        %v278 = vld [vmem:[%s237 + $0xc] sm:$0xf]
        %v279 = vld [vmem:[%s237 + $0x10] sm:$0xf]
        %v280 = vld [vmem:[%s237 + $0x14] sm:$0xf]
        %v281 = vld [vmem:[%s237 + $0x18] sm:$0xf]
        %v282 = vld [vmem:[%s237 + $0x1c] sm:$0xf]
        %v283 = vunpack.c.l.bf16 %v275
        %v284 = vunpack.c.l.bf16 %v276
        %v285 = vunpack.c.l.bf16 %v277
        %v286 = vunpack.c.l.bf16 %v278
        %v287 = vunpack.c.l.bf16 %v279
        %v288 = vunpack.c.l.bf16 %v280
        %v289 = vunpack.c.l.bf16 %v281
        %v290 = vunpack.c.l.bf16 %v282
        %v291 = vld [vmem:[%s4] sm:$0x1]
        %v292 = vunpack.c.l.bf16 %v291
        %v293 = vlaneseq
        %v294 = vshrl.u32 %v293, 7
        %v295 = vsub.s32 0, %v294
        %v296 = vrot.slane %v292, %v295
        %v297 = vadd.f32 %v283, %v296
        %v298 = vadd.f32 %v284, %v296
        %v299 = vadd.f32 %v285, %v296
        %v300 = vadd.f32 %v286, %v296
        %v301 = vadd.f32 %v287, %v296
        %v302 = vadd.f32 %v288, %v296
        %v303 = vadd.f32 %v289, %v296
        %v304 = vadd.f32 %v290, %v296
        %305 = vst [vmem:[#allocation2] sm:$0xff] %v297
        %306 = vst [vmem:[#allocation2 + $0x8] sm:$0xff] %v298
        %307 = vst [vmem:[#allocation2 + $0x10] sm:$0xff] %v299
        %308 = vst [vmem:[#allocation2 + $0x18] sm:$0xff] %v300
        %309 = vst [vmem:[#allocation2 + $0x20] sm:$0xff] %v301
        %310 = vst [vmem:[#allocation2 + $0x28] sm:$0xff] %v302
        %311 = vst [vmem:[#allocation2 + $0x30] sm:$0xff] %v303
        %312 = vst [vmem:[#allocation2 + $0x38] sm:$0xff] %v304
        %v313 = vld [vmem:[#allocation6] sm:$0xf]
        %v314 = vld [vmem:[#allocation6 + $0x8] sm:$0xf]
        %v315 = vld [vmem:[#allocation6 + $0x10] sm:$0xf]
        %v316 = vld [vmem:[#allocation6 + $0x18] sm:$0xf]
        %v317 = vld [vmem:[#allocation6 + $0x20] sm:$0xf]
        %v318 = vld [vmem:[#allocation6 + $0x28] sm:$0xf]
        %v319 = vld [vmem:[#allocation6 + $0x30] sm:$0xf]
        %v320 = vld [vmem:[#allocation6 + $0x38] sm:$0xf]
        %v321 = vld [vmem:[#allocation6 + $0x40] sm:$0xf]
        %v322 = vld [vmem:[#allocation6 + $0x48] sm:$0xf]
        %v323 = vld [vmem:[#allocation6 + $0x50] sm:$0xf]
        %v324 = vld [vmem:[#allocation6 + $0x58] sm:$0xf]
        %v325 = vld [vmem:[#allocation6 + $0x60] sm:$0xf]
        %v326 = vld [vmem:[#allocation6 + $0x68] sm:$0xf]
        %v327 = vld [vmem:[#allocation6 + $0x70] sm:$0xf]
        %v328 = vld [vmem:[#allocation6 + $0x78] sm:$0xf]
        %v329 = vld [vmem:[%s2] sm:$0x1]
        %v330 = vunpack.c.l.bf16 %v329
        %v331 = vlaneseq
        %v332 = vshrl.u32 %v331, 7
        %v333 = vsub.s32 0, %v332
        %v334 = vrot.slane %v330, %v333
        %v343 = vunpack.c.l.b16 %v275
        %v344 = vunpack.c.l.b16 %v276
        %v345 = vunpack.c.l.b16 %v277
        %v346 = vunpack.c.l.b16 %v278
        %v347 = vunpack.c.l.b16 %v279
        %v348 = vunpack.c.l.b16 %v280
        %v349 = vunpack.c.l.b16 %v281
        %v350 = vunpack.c.l.b16 %v282
        %v351 = vpack.c.b16 %v344, %v343
        %v352 = vpack.c.b16 %v346, %v345
        %v353 = vpack.c.b16 %v348, %v347
        %v354 = vpack.c.b16 %v350, %v349
        %v375 = vunpack.c.l.b16 %v313
        %v376 = vunpack.c.l.b16 %v314
        %v377 = vunpack.c.l.b16 %v315
        %v378 = vunpack.c.l.b16 %v316
        %v379 = vunpack.c.l.b16 %v317
        %v380 = vunpack.c.l.b16 %v318
        %v381 = vunpack.c.l.b16 %v319
        %v382 = vunpack.c.l.b16 %v320
        %v383 = vunpack.c.l.b16 %v321
        %v384 = vunpack.c.l.b16 %v322
        %v385 = vunpack.c.l.b16 %v323
        %v386 = vunpack.c.l.b16 %v324
        %v387 = vunpack.c.l.b16 %v325
        %v388 = vunpack.c.l.b16 %v326
        %v389 = vunpack.c.l.b16 %v327
        %v390 = vunpack.c.l.b16 %v328
        %v391 = vpack.c.b16 %v376, %v375
        %v392 = vpack.c.b16 %v378, %v377
        %v393 = vpack.c.b16 %v380, %v379
        %v394 = vpack.c.b16 %v382, %v381
        %v395 = vpack.c.b16 %v384, %v383
        %v396 = vpack.c.b16 %v386, %v385
        %v397 = vpack.c.b16 %v388, %v387
        %v398 = vpack.c.b16 %v390, %v389
        %407 = vmatprep.subr.bf16.mxu0 0
        %408 = vmatpush1.bf16.msra.mxu0 %v391
        %409 = vmatprep.subr.bf16.mxu0 0
        %410 = vmatpush1.bf16.msra.mxu0 %v392
        %411 = vmatprep.subr.bf16.mxu0 0
        %412 = vmatpush1.bf16.msra.mxu0 %v393
        %413 = vmatprep.subr.bf16.mxu0 0
        %414 = vmatpush1.bf16.msra.mxu0 %v394
        %415 = vmatprep.subr.bf16.mxu0 0
        %416 = vmatpush1.bf16.msra.mxu0 %v395
        %417 = vmatprep.subr.bf16.mxu0 0
        %418 = vmatpush1.bf16.msra.mxu0 %v396
        %419 = vmatprep.subr.bf16.mxu0 0
        %420 = vmatpush1.bf16.msra.mxu0 %v397
        %421 = vmatprep.subr.bf16.mxu0 0
        %422 = vmatpush1.bf16.msra.mxu0 %v398
        %423 = vmatprep.subr.bf16.mxu0 0
        %424 = vmatpush1.bf16.msra.mxu0 0
        %425 = vmatprep.subr.bf16.mxu0 0
        %426 = vmatpush1.bf16.msra.mxu0 0
        %427 = vmatprep.subr.bf16.mxu0 0
        %428 = vmatpush1.bf16.msra.mxu0 0
        %429 = vmatprep.subr.bf16.mxu0 0
        %430 = vmatpush1.bf16.msra.mxu0 0
        %431 = vmatprep.subr.bf16.mxu0 0
        %432 = vmatpush1.bf16.msra.mxu0 0
        %433 = vmatprep.subr.bf16.mxu0 0
        %434 = vmatpush1.bf16.msra.mxu0 0
        %435 = vmatprep.subr.bf16.mxu0 0
        %436 = vmatpush1.bf16.msra.mxu0 0
        %437 = vmatprep.subr.bf16.mxu0 0
        %438 = vmatpush1.bf16.msra.mxu0 0
        %439 = vmatprep.mubr.bf16.mxu0 0
        %440 = vmatmul.mubr.bf16.gmra.mrb[0].mxu0 %v351
        %v441 = vpop.f32.mrb[0].mxu0
        %v442 = vadd.f32 %v334, %v441
        %v443 = vpop.f32.mrb[0].mxu0
        %v444 = vpop.f32.mrb[0].mxu0
        %v445 = vadd.f32 %v334, %v444
        %v446 = vpop.f32.mrb[0].mxu0
        %447 = vmatprep.mubr.bf16.mxu0 0
        %448 = vmatmul.mubr.bf16.gmra.mrb[0].mxu0 %v352
        %v449 = vpop.f32.mrb[0].mxu0
        %v450 = vadd.f32 %v334, %v449
        %v451 = vpop.f32.mrb[0].mxu0
        %v452 = vpop.f32.mrb[0].mxu0
        %v453 = vadd.f32 %v334, %v452
        %v454 = vpop.f32.mrb[0].mxu0
        %455 = vmatprep.mubr.bf16.mxu0 0
        %456 = vmatmul.mubr.bf16.gmra.mrb[0].mxu0 %v353
        %v457 = vpop.f32.mrb[0].mxu0
        %v458 = vadd.f32 %v334, %v457
        %v459 = vpop.f32.mrb[0].mxu0
        %v460 = vpop.f32.mrb[0].mxu0
        %v461 = vadd.f32 %v334, %v460
        %v462 = vpop.f32.mrb[0].mxu0
        %463 = vmatprep.mubr.bf16.mxu0 0
        %464 = vmatmul.mubr.bf16.gmra.mrb[0].mxu0 %v354
        %v465 = vpop.f32.mrb[0].mxu0
        %v466 = vadd.f32 %v334, %v465
        %v467 = vpop.f32.mrb[0].mxu0
        %v468 = vpop.f32.mrb[0].mxu0
        %v469 = vadd.f32 %v334, %v468
        %v470 = vpop.f32.mrb[0].mxu0
        %471 = vdwg.mxu0
        %v472 = vmul.f32 %v442, 0.5
        %v473 = vmul.f32 %v445, 0.5
        %v474 = vmul.f32 %v450, 0.5
        %v475 = vmul.f32 %v453, 0.5
        %v476 = vmul.f32 %v458, 0.5
        %v477 = vmul.f32 %v461, 0.5
        %v478 = vmul.f32 %v466, 0.5
        %v479 = vmul.f32 %v469, 0.5
        %v480 = vmul.f32 %v442, 0.044715
        %v481 = vmul.f32 %v445, 0.044715
        %v482 = vmul.f32 %v450, 0.044715
        %v483 = vmul.f32 %v453, 0.044715
        %v484 = vmul.f32 %v458, 0.044715
        %v485 = vmul.f32 %v461, 0.044715
        %v486 = vmul.f32 %v466, 0.044715
        %v487 = vmul.f32 %v469, 0.044715
        %v488 = vmul.f32 %v480, %v442
        %v489 = vmul.f32 %v481, %v445
        %v490 = vmul.f32 %v482, %v450
        %v491 = vmul.f32 %v483, %v453
        %v492 = vmul.f32 %v484, %v458
        %v493 = vmul.f32 %v485, %v461
        %v494 = vmul.f32 %v486, %v466
        %v495 = vmul.f32 %v487, %v469
        %v496 = vmul.f32 %v488, %v442
        %v497 = vmul.f32 %v489, %v445
        %v498 = vmul.f32 %v490, %v450
        %v499 = vmul.f32 %v491, %v453
        %v500 = vmul.f32 %v492, %v458
        %v501 = vmul.f32 %v493, %v461
        %v502 = vmul.f32 %v494, %v466
        %v503 = vmul.f32 %v495, %v469
        %v504 = vadd.f32 %v442, %v496
        %v505 = vadd.f32 %v445, %v497
        %v506 = vadd.f32 %v450, %v498
        %v507 = vadd.f32 %v453, %v499
        %v508 = vadd.f32 %v458, %v500
        %v509 = vadd.f32 %v461, %v501
        %v510 = vadd.f32 %v466, %v502
        %v511 = vadd.f32 %v469, %v503
        %v512 = vmul.f32 %v504, 0.7978846
        %v513 = vmul.f32 %v505, 0.7978846
        %v514 = vmul.f32 %v506, 0.7978846
        %v515 = vmul.f32 %v507, 0.7978846
        %v516 = vmul.f32 %v508, 0.7978846
        %v517 = vmul.f32 %v509, 0.7978846
        %v518 = vmul.f32 %v510, 0.7978846
        %v519 = vmul.f32 %v511, 0.7978846
        %v520 = vtanh.pop %v512
        %v521 = vtanh.pop %v513
        %v522 = vtanh.pop %v514
        %v523 = vtanh.pop %v515
        %v524 = vtanh.pop %v516
        %v525 = vtanh.pop %v517
        %v526 = vtanh.pop %v518
        %v527 = vtanh.pop %v519
        %v528 = vadd.f32 %v520, 1.0
        %v529 = vadd.f32 %v521, 1.0
        %v530 = vadd.f32 %v522, 1.0
        %v531 = vadd.f32 %v523, 1.0
        %v532 = vadd.f32 %v524, 1.0
        %v533 = vadd.f32 %v525, 1.0
        %v534 = vadd.f32 %v526, 1.0
        %v535 = vadd.f32 %v527, 1.0
        %v536 = vmul.f32 %v472, %v528
        %v537 = vmul.f32 %v473, %v529
        %v538 = vmul.f32 %v474, %v530
        %v539 = vmul.f32 %v475, %v531
        %v540 = vmul.f32 %v476, %v532
        %v541 = vmul.f32 %v477, %v533
        %v542 = vmul.f32 %v478, %v534
        %v543 = vmul.f32 %v479, %v535
        %v544 = vld [vmem:[#allocation2] sm:$0xff]
        %v545 = vld [vmem:[#allocation2 + $0x8] sm:$0xff]
        %v546 = vld [vmem:[#allocation2 + $0x10] sm:$0xff]
        %v547 = vld [vmem:[#allocation2 + $0x18] sm:$0xff]
        %v548 = vld [vmem:[#allocation2 + $0x20] sm:$0xff]
        %v549 = vld [vmem:[#allocation2 + $0x28] sm:$0xff]
        %v550 = vld [vmem:[#allocation2 + $0x30] sm:$0xff]
        %v551 = vld [vmem:[#allocation2 + $0x38] sm:$0xff]
        %v552 = vpack.c.bf16 %v537, %v536
        %v553 = vpack.c.bf16 %v539, %v538
        %v554 = vpack.c.bf16 %v541, %v540
        %v555 = vpack.c.bf16 %v543, %v542
        %v556 = vld [vmem:[#allocation8] sm:$0xf]
        %v557 = vld [vmem:[#allocation8 + $0x4] sm:$0xf]
        %v558 = vld [vmem:[#allocation8 + $0x8] sm:$0xf]
        %v559 = vld [vmem:[#allocation8 + $0xc] sm:$0xf]
        %v560 = vld [vmem:[#allocation8 + $0x10] sm:$0xf]
        %v561 = vld [vmem:[#allocation8 + $0x14] sm:$0xf]
        %v562 = vld [vmem:[#allocation8 + $0x18] sm:$0xf]
        %v563 = vld [vmem:[#allocation8 + $0x1c] sm:$0xf]
        %v564 = vld [vmem:[#allocation8 + $0x20] sm:$0xf]
        %v565 = vld [vmem:[#allocation8 + $0x24] sm:$0xf]
        %v566 = vld [vmem:[#allocation8 + $0x28] sm:$0xf]
        %v567 = vld [vmem:[#allocation8 + $0x2c] sm:$0xf]
        %v568 = vld [vmem:[#allocation8 + $0x30] sm:$0xf]
        %v569 = vld [vmem:[#allocation8 + $0x34] sm:$0xf]
        %v570 = vld [vmem:[#allocation8 + $0x38] sm:$0xf]
        %v571 = vld [vmem:[#allocation8 + $0x3c] sm:$0xf]
        %v588 = vunpack.c.l.b16 %v556
        %v589 = vunpack.c.l.b16 %v557
        %v590 = vunpack.c.l.b16 %v558
        %v591 = vunpack.c.l.b16 %v559
        %v592 = vunpack.c.l.b16 %v560
        %v593 = vunpack.c.l.b16 %v561
        %v594 = vunpack.c.l.b16 %v562
        %v595 = vunpack.c.l.b16 %v563
        %v596 = vunpack.c.l.b16 %v564
        %v597 = vunpack.c.l.b16 %v565
        %v598 = vunpack.c.l.b16 %v566
        %v599 = vunpack.c.l.b16 %v567
        %v600 = vunpack.c.l.b16 %v568
        %v601 = vunpack.c.l.b16 %v569
        %v602 = vunpack.c.l.b16 %v570
        %v603 = vunpack.c.l.b16 %v571
        %v604 = vpack.c.b16 %v589, %v588
        %v605 = vpack.c.b16 %v591, %v590
        %v606 = vpack.c.b16 %v593, %v592
        %v607 = vpack.c.b16 %v595, %v594
        %v608 = vpack.c.b16 %v597, %v596
        %v609 = vpack.c.b16 %v599, %v598
        %v610 = vpack.c.b16 %v601, %v600
        %v611 = vpack.c.b16 %v603, %v602
        %620 = vmatprep.subr.bf16.mxu0 0
        %621 = vmatpush1.bf16.msra.mxu0 %v604
        %622 = vmatprep.subr.bf16.mxu0 0
        %623 = vmatpush1.bf16.msra.mxu0 %v605
        %624 = vmatprep.subr.bf16.mxu0 0
        %625 = vmatpush1.bf16.msra.mxu0 %v606
        %626 = vmatprep.subr.bf16.mxu0 0
        %627 = vmatpush1.bf16.msra.mxu0 %v607
        %628 = vmatprep.subr.bf16.mxu0 0
        %629 = vmatpush1.bf16.msra.mxu0 %v608
        %630 = vmatprep.subr.bf16.mxu0 0
        %631 = vmatpush1.bf16.msra.mxu0 %v609
        %632 = vmatprep.subr.bf16.mxu0 0
        %633 = vmatpush1.bf16.msra.mxu0 %v610
        %634 = vmatprep.subr.bf16.mxu0 0
        %635 = vmatpush1.bf16.msra.mxu0 %v611
        %636 = vmatprep.subr.bf16.mxu0 0
        %637 = vmatpush1.bf16.msra.mxu0 0
        %638 = vmatprep.subr.bf16.mxu0 0
        %639 = vmatpush1.bf16.msra.mxu0 0
        %640 = vmatprep.subr.bf16.mxu0 0
        %641 = vmatpush1.bf16.msra.mxu0 0
        %642 = vmatprep.subr.bf16.mxu0 0
        %643 = vmatpush1.bf16.msra.mxu0 0
        %644 = vmatprep.subr.bf16.mxu0 0
        %645 = vmatpush1.bf16.msra.mxu0 0
        %646 = vmatprep.subr.bf16.mxu0 0
        %647 = vmatpush1.bf16.msra.mxu0 0
        %648 = vmatprep.subr.bf16.mxu0 0
        %649 = vmatpush1.bf16.msra.mxu0 0
        %650 = vmatprep.subr.bf16.mxu0 0
        %651 = vmatpush1.bf16.msra.mxu0 0
        %652 = vmatprep.mubr.bf16.mxu0 0
        %653 = vmatmul.mubr.bf16.gmra.mrb[0].mxu0 %v552
        %v654 = vpop.f32.mrb[0].mxu0
        %v655 = vadd.f32 0.0, %v654
        %v656 = vpop.f32.mrb[0].mxu0
        %v657 = vpop.f32.mrb[0].mxu0
        %v658 = vadd.f32 0.0, %v657
        %v659 = vpop.f32.mrb[0].mxu0
        %660 = vmatprep.mubr.bf16.mxu0 0
        %661 = vmatmul.mubr.bf16.gmra.mrb[0].mxu0 %v553
        %v662 = vpop.f32.mrb[0].mxu0
        %v663 = vadd.f32 0.0, %v662
        %v664 = vpop.f32.mrb[0].mxu0
        %v665 = vpop.f32.mrb[0].mxu0
        %v666 = vadd.f32 0.0, %v665
        %v667 = vpop.f32.mrb[0].mxu0
        %668 = vmatprep.mubr.bf16.mxu0 0
        %669 = vmatmul.mubr.bf16.gmra.mrb[0].mxu0 %v554
        %v670 = vpop.f32.mrb[0].mxu0
        %v671 = vadd.f32 0.0, %v670
        %v672 = vpop.f32.mrb[0].mxu0
        %v673 = vpop.f32.mrb[0].mxu0
        %v674 = vadd.f32 0.0, %v673
        %v675 = vpop.f32.mrb[0].mxu0
        %676 = vmatprep.mubr.bf16.mxu0 0
        %677 = vmatmul.mubr.bf16.gmra.mrb[0].mxu0 %v555
        %v678 = vpop.f32.mrb[0].mxu0
        %v679 = vadd.f32 0.0, %v678
        %v680 = vpop.f32.mrb[0].mxu0
        %v681 = vpop.f32.mrb[0].mxu0
        %v682 = vadd.f32 0.0, %v681
        %v683 = vpop.f32.mrb[0].mxu0
        %684 = vdwg.mxu0
        %v685 = vadd.f32 %v544, %v655
        %v686 = vadd.f32 %v545, %v658
        %v687 = vadd.f32 %v546, %v663
        %v688 = vadd.f32 %v547, %v666
        %v689 = vadd.f32 %v548, %v671
        %v690 = vadd.f32 %v549, %v674
        %v691 = vadd.f32 %v550, %v679
        %v692 = vadd.f32 %v551, %v682
        %693 = vst [vmem:[#allocation2] sm:$0xff] %v685
        %694 = vst [vmem:[#allocation2 + $0x8] sm:$0xff] %v686
        %695 = vst [vmem:[#allocation2 + $0x10] sm:$0xff] %v687
        %696 = vst [vmem:[#allocation2 + $0x18] sm:$0xff] %v688
        %697 = vst [vmem:[#allocation2 + $0x20] sm:$0xff] %v689
        %698 = vst [vmem:[#allocation2 + $0x28] sm:$0xff] %v690
        %699 = vst [vmem:[#allocation2 + $0x30] sm:$0xff] %v691
        %700 = vst [vmem:[#allocation2 + $0x38] sm:$0xff] %v692
        %v701 = vld [vmem:[#allocation6 + $0x4] sm:$0xf]
        %v702 = vld [vmem:[#allocation6 + $0xc] sm:$0xf]
        %v703 = vld [vmem:[#allocation6 + $0x14] sm:$0xf]
        %v704 = vld [vmem:[#allocation6 + $0x1c] sm:$0xf]
        %v705 = vld [vmem:[#allocation6 + $0x24] sm:$0xf]
        %v706 = vld [vmem:[#allocation6 + $0x2c] sm:$0xf]
        %v707 = vld [vmem:[#allocation6 + $0x34] sm:$0xf]
        %v708 = vld [vmem:[#allocation6 + $0x3c] sm:$0xf]
        %v709 = vld [vmem:[#allocation6 + $0x44] sm:$0xf]
        %v710 = vld [vmem:[#allocation6 + $0x4c] sm:$0xf]
        %v711 = vld [vmem:[#allocation6 + $0x54] sm:$0xf]
        %v712 = vld [vmem:[#allocation6 + $0x5c] sm:$0xf]
        %v713 = vld [vmem:[#allocation6 + $0x64] sm:$0xf]
        %v714 = vld [vmem:[#allocation6 + $0x6c] sm:$0xf]
        %v715 = vld [vmem:[#allocation6 + $0x74] sm:$0xf]
        %v716 = vld [vmem:[#allocation6 + $0x7c] sm:$0xf]
        %v717 = vld [vmem:[%s2 + $0x1] sm:$0x1]
        %v718 = vunpack.c.l.bf16 %v717
        %v719 = vlaneseq
        %v720 = vshrl.u32 %v719, 7
        %v721 = vsub.s32 0, %v720
        %v722 = vrot.slane %v718, %v721
        %v739 = vunpack.c.l.b16 %v701
        %v740 = vunpack.c.l.b16 %v702
        %v741 = vunpack.c.l.b16 %v703
        %v742 = vunpack.c.l.b16 %v704
        %v743 = vunpack.c.l.b16 %v705
        %v744 = vunpack.c.l.b16 %v706
        %v745 = vunpack.c.l.b16 %v707
        %v746 = vunpack.c.l.b16 %v708
        %v747 = vunpack.c.l.b16 %v709
        %v748 = vunpack.c.l.b16 %v710
        %v749 = vunpack.c.l.b16 %v711
        %v750 = vunpack.c.l.b16 %v712
        %v751 = vunpack.c.l.b16 %v713
        %v752 = vunpack.c.l.b16 %v714
        %v753 = vunpack.c.l.b16 %v715
        %v754 = vunpack.c.l.b16 %v716
        %v755 = vpack.c.b16 %v740, %v739
        %v756 = vpack.c.b16 %v742, %v741
        %v757 = vpack.c.b16 %v744, %v743
        %v758 = vpack.c.b16 %v746, %v745
        %v759 = vpack.c.b16 %v748, %v747
        %v760 = vpack.c.b16 %v750, %v749
        %v761 = vpack.c.b16 %v752, %v751
        %v762 = vpack.c.b16 %v754, %v753
        %771 = vmatprep.subr.bf16.mxu0 0
        %772 = vmatpush1.bf16.msra.mxu0 %v755
        %773 = vmatprep.subr.bf16.mxu0 0
        %774 = vmatpush1.bf16.msra.mxu0 %v756
        %775 = vmatprep.subr.bf16.mxu0 0
        %776 = vmatpush1.bf16.msra.mxu0 %v757
        %777 = vmatprep.subr.bf16.mxu0 0
        %778 = vmatpush1.bf16.msra.mxu0 %v758
        %779 = vmatprep.subr.bf16.mxu0 0
        %780 = vmatpush1.bf16.msra.mxu0 %v759
        %781 = vmatprep.subr.bf16.mxu0 0
        %782 = vmatpush1.bf16.msra.mxu0 %v760
        %783 = vmatprep.subr.bf16.mxu0 0
        %784 = vmatpush1.bf16.msra.mxu0 %v761
        %785 = vmatprep.subr.bf16.mxu0 0
        %786 = vmatpush1.bf16.msra.mxu0 %v762
        %787 = vmatprep.subr.bf16.mxu0 0
        %788 = vmatpush1.bf16.msra.mxu0 0
        %789 = vmatprep.subr.bf16.mxu0 0
        %790 = vmatpush1.bf16.msra.mxu0 0
        %791 = vmatprep.subr.bf16.mxu0 0
        %792 = vmatpush1.bf16.msra.mxu0 0
        %793 = vmatprep.subr.bf16.mxu0 0
        %794 = vmatpush1.bf16.msra.mxu0 0
        %795 = vmatprep.subr.bf16.mxu0 0
        %796 = vmatpush1.bf16.msra.mxu0 0
        %797 = vmatprep.subr.bf16.mxu0 0
        %798 = vmatpush1.bf16.msra.mxu0 0
        %799 = vmatprep.subr.bf16.mxu0 0
        %800 = vmatpush1.bf16.msra.mxu0 0
        %801 = vmatprep.subr.bf16.mxu0 0
        %802 = vmatpush1.bf16.msra.mxu0 0
        %803 = vmatprep.mubr.bf16.mxu0 0
        %804 = vmatmul.mubr.bf16.gmra.mrb[0].mxu0 %v351
        %v805 = vpop.f32.mrb[0].mxu0
        %v806 = vadd.f32 %v722, %v805
        %v807 = vpop.f32.mrb[0].mxu0
        %v808 = vpop.f32.mrb[0].mxu0
        %v809 = vadd.f32 %v722, %v808
        %v810 = vpop.f32.mrb[0].mxu0
        %811 = vmatprep.mubr.bf16.mxu0 0
        %812 = vmatmul.mubr.bf16.gmra.mrb[0].mxu0 %v352
        %v813 = vpop.f32.mrb[0].mxu0
        %v814 = vadd.f32 %v722, %v813
        %v815 = vpop.f32.mrb[0].mxu0
        %v816 = vpop.f32.mrb[0].mxu0
        %v817 = vadd.f32 %v722, %v816
        %v818 = vpop.f32.mrb[0].mxu0
        %819 = vmatprep.mubr.bf16.mxu0 0
        %820 = vmatmul.mubr.bf16.gmra.mrb[0].mxu0 %v353
        %v821 = vpop.f32.mrb[0].mxu0
        %v822 = vadd.f32 %v722, %v821
        %v823 = vpop.f32.mrb[0].mxu0
        %v824 = vpop.f32.mrb[0].mxu0
        %v825 = vadd.f32 %v722, %v824
        %v826 = vpop.f32.mrb[0].mxu0
        %827 = vmatprep.mubr.bf16.mxu0 0
        %828 = vmatmul.mubr.bf16.gmra.mrb[0].mxu0 %v354
        %v829 = vpop.f32.mrb[0].mxu0
        %v830 = vadd.f32 %v722, %v829
        %v831 = vpop.f32.mrb[0].mxu0
        %v832 = vpop.f32.mrb[0].mxu0
        %v833 = vadd.f32 %v722, %v832
        %v834 = vpop.f32.mrb[0].mxu0
        %835 = vdwg.mxu0
        %v836 = vmul.f32 %v806, 0.5
        %v837 = vmul.f32 %v809, 0.5
        %v838 = vmul.f32 %v814, 0.5
        %v839 = vmul.f32 %v817, 0.5
        %v840 = vmul.f32 %v822, 0.5
        %v841 = vmul.f32 %v825, 0.5
        %v842 = vmul.f32 %v830, 0.5
        %v843 = vmul.f32 %v833, 0.5
        %v844 = vmul.f32 %v806, 0.044715
        %v845 = vmul.f32 %v809, 0.044715
        %v846 = vmul.f32 %v814, 0.044715
        %v847 = vmul.f32 %v817, 0.044715
        %v848 = vmul.f32 %v822, 0.044715
        %v849 = vmul.f32 %v825, 0.044715
        %v850 = vmul.f32 %v830, 0.044715
        %v851 = vmul.f32 %v833, 0.044715
        %v852 = vmul.f32 %v844, %v806
        %v853 = vmul.f32 %v845, %v809
        %v854 = vmul.f32 %v846, %v814
        %v855 = vmul.f32 %v847, %v817
        %v856 = vmul.f32 %v848, %v822
        %v857 = vmul.f32 %v849, %v825
        %v858 = vmul.f32 %v850, %v830
        %v859 = vmul.f32 %v851, %v833
        %v860 = vmul.f32 %v852, %v806
        %v861 = vmul.f32 %v853, %v809
        %v862 = vmul.f32 %v854, %v814
        %v863 = vmul.f32 %v855, %v817
        %v864 = vmul.f32 %v856, %v822
        %v865 = vmul.f32 %v857, %v825
        %v866 = vmul.f32 %v858, %v830
        %v867 = vmul.f32 %v859, %v833
        %v868 = vadd.f32 %v806, %v860
        %v869 = vadd.f32 %v809, %v861
        %v870 = vadd.f32 %v814, %v862
        %v871 = vadd.f32 %v817, %v863
        %v872 = vadd.f32 %v822, %v864
        %v873 = vadd.f32 %v825, %v865
        %v874 = vadd.f32 %v830, %v866
        %v875 = vadd.f32 %v833, %v867
        %v876 = vmul.f32 %v868, 0.7978846
        %v877 = vmul.f32 %v869, 0.7978846
        %v878 = vmul.f32 %v870, 0.7978846
        %v879 = vmul.f32 %v871, 0.7978846
        %v880 = vmul.f32 %v872, 0.7978846
        %v881 = vmul.f32 %v873, 0.7978846
        %v882 = vmul.f32 %v874, 0.7978846
        %v883 = vmul.f32 %v875, 0.7978846
        %v884 = vtanh.pop %v876
        %v885 = vtanh.pop %v877
        %v886 = vtanh.pop %v878
        %v887 = vtanh.pop %v879
        %v888 = vtanh.pop %v880
        %v889 = vtanh.pop %v881
        %v890 = vtanh.pop %v882
        %v891 = vtanh.pop %v883
        %v892 = vadd.f32 %v884, 1.0
        %v893 = vadd.f32 %v885, 1.0
        %v894 = vadd.f32 %v886, 1.0
        %v895 = vadd.f32 %v887, 1.0
        %v896 = vadd.f32 %v888, 1.0
        %v897 = vadd.f32 %v889, 1.0
        %v898 = vadd.f32 %v890, 1.0
        %v899 = vadd.f32 %v891, 1.0
        %v900 = vmul.f32 %v836, %v892
        %v901 = vmul.f32 %v837, %v893
        %v902 = vmul.f32 %v838, %v894
        %v903 = vmul.f32 %v839, %v895
        %v904 = vmul.f32 %v840, %v896
        %v905 = vmul.f32 %v841, %v897
        %v906 = vmul.f32 %v842, %v898
        %v907 = vmul.f32 %v843, %v899
        %v908 = vld [vmem:[#allocation2] sm:$0xff]
        %v909 = vld [vmem:[#allocation2 + $0x8] sm:$0xff]
        %v910 = vld [vmem:[#allocation2 + $0x10] sm:$0xff]
        %v911 = vld [vmem:[#allocation2 + $0x18] sm:$0xff]
        %v912 = vld [vmem:[#allocation2 + $0x20] sm:$0xff]
        %v913 = vld [vmem:[#allocation2 + $0x28] sm:$0xff]
        %v914 = vld [vmem:[#allocation2 + $0x30] sm:$0xff]
        %v915 = vld [vmem:[#allocation2 + $0x38] sm:$0xff]
        %v916 = vpack.c.bf16 %v901, %v900
        %v917 = vpack.c.bf16 %v903, %v902
        %v918 = vpack.c.bf16 %v905, %v904
        %v919 = vpack.c.bf16 %v907, %v906
        %v920 = vld [vmem:[#allocation8 + $0x40] sm:$0xf]
        %v921 = vld [vmem:[#allocation8 + $0x44] sm:$0xf]
        %v922 = vld [vmem:[#allocation8 + $0x48] sm:$0xf]
        %v923 = vld [vmem:[#allocation8 + $0x4c] sm:$0xf]
        %v924 = vld [vmem:[#allocation8 + $0x50] sm:$0xf]
        %v925 = vld [vmem:[#allocation8 + $0x54] sm:$0xf]
        %v926 = vld [vmem:[#allocation8 + $0x58] sm:$0xf]
        %v927 = vld [vmem:[#allocation8 + $0x5c] sm:$0xf]
        %v928 = vld [vmem:[#allocation8 + $0x60] sm:$0xf]
        %v929 = vld [vmem:[#allocation8 + $0x64] sm:$0xf]
        %v930 = vld [vmem:[#allocation8 + $0x68] sm:$0xf]
        %v931 = vld [vmem:[#allocation8 + $0x6c] sm:$0xf]
        %v932 = vld [vmem:[#allocation8 + $0x70] sm:$0xf]
        %v933 = vld [vmem:[#allocation8 + $0x74] sm:$0xf]
        %v934 = vld [vmem:[#allocation8 + $0x78] sm:$0xf]
        %v935 = vld [vmem:[#allocation8 + $0x7c] sm:$0xf]
        %v952 = vunpack.c.l.b16 %v920
        %v953 = vunpack.c.l.b16 %v921
        %v954 = vunpack.c.l.b16 %v922
        %v955 = vunpack.c.l.b16 %v923
        %v956 = vunpack.c.l.b16 %v924
        %v957 = vunpack.c.l.b16 %v925
        %v958 = vunpack.c.l.b16 %v926
        %v959 = vunpack.c.l.b16 %v927
        %v960 = vunpack.c.l.b16 %v928
        %v961 = vunpack.c.l.b16 %v929
        %v962 = vunpack.c.l.b16 %v930
        %v963 = vunpack.c.l.b16 %v931
        %v964 = vunpack.c.l.b16 %v932
        %v965 = vunpack.c.l.b16 %v933
        %v966 = vunpack.c.l.b16 %v934
        %v967 = vunpack.c.l.b16 %v935
        %v968 = vpack.c.b16 %v953, %v952
        %v969 = vpack.c.b16 %v955, %v954
        %v970 = vpack.c.b16 %v957, %v956
        %v971 = vpack.c.b16 %v959, %v958
        %v972 = vpack.c.b16 %v961, %v960
        %v973 = vpack.c.b16 %v963, %v962
        %v974 = vpack.c.b16 %v965, %v964
        %v975 = vpack.c.b16 %v967, %v966
        %984 = vmatprep.subr.bf16.mxu0 0
        %985 = vmatpush1.bf16.msra.mxu0 %v968
        %986 = vmatprep.subr.bf16.mxu0 0
        %987 = vmatpush1.bf16.msra.mxu0 %v969
        %988 = vmatprep.subr.bf16.mxu0 0
        %989 = vmatpush1.bf16.msra.mxu0 %v970
        %990 = vmatprep.subr.bf16.mxu0 0
        %991 = vmatpush1.bf16.msra.mxu0 %v971
        %992 = vmatprep.subr.bf16.mxu0 0
        %993 = vmatpush1.bf16.msra.mxu0 %v972
        %994 = vmatprep.subr.bf16.mxu0 0
        %995 = vmatpush1.bf16.msra.mxu0 %v973
        %996 = vmatprep.subr.bf16.mxu0 0
        %997 = vmatpush1.bf16.msra.mxu0 %v974
        %998 = vmatprep.subr.bf16.mxu0 0
        %999 = vmatpush1.bf16.msra.mxu0 %v975
        %1000 = vmatprep.subr.bf16.mxu0 0
        %1001 = vmatpush1.bf16.msra.mxu0 0
        %1002 = vmatprep.subr.bf16.mxu0 0
        %1003 = vmatpush1.bf16.msra.mxu0 0
        %1004 = vmatprep.subr.bf16.mxu0 0
        %1005 = vmatpush1.bf16.msra.mxu0 0
        %1006 = vmatprep.subr.bf16.mxu0 0
        %1007 = vmatpush1.bf16.msra.mxu0 0
        %1008 = vmatprep.subr.bf16.mxu0 0
        %1009 = vmatpush1.bf16.msra.mxu0 0
        %1010 = vmatprep.subr.bf16.mxu0 0
        %1011 = vmatpush1.bf16.msra.mxu0 0
        %1012 = vmatprep.subr.bf16.mxu0 0
        %1013 = vmatpush1.bf16.msra.mxu0 0
        %1014 = vmatprep.subr.bf16.mxu0 0
        %1015 = vmatpush1.bf16.msra.mxu0 0
        %1016 = vmatprep.mubr.bf16.mxu0 0
        %1017 = vmatmul.mubr.bf16.gmra.mrb[0].mxu0 %v916
        %v1018 = vpop.f32.mrb[0].mxu0
        %v1019 = vadd.f32 0.0, %v1018
        %v1020 = vpop.f32.mrb[0].mxu0
        %v1021 = vpop.f32.mrb[0].mxu0
        %v1022 = vadd.f32 0.0, %v1021
        %v1023 = vpop.f32.mrb[0].mxu0
        %1024 = vmatprep.mubr.bf16.mxu0 0
        %1025 = vmatmul.mubr.bf16.gmra.mrb[0].mxu0 %v917
        %v1026 = vpop.f32.mrb[0].mxu0
        %v1027 = vadd.f32 0.0, %v1026
        %v1028 = vpop.f32.mrb[0].mxu0
        %v1029 = vpop.f32.mrb[0].mxu0
        %v1030 = vadd.f32 0.0, %v1029
        %v1031 = vpop.f32.mrb[0].mxu0
        %1032 = vmatprep.mubr.bf16.mxu0 0
        %1033 = vmatmul.mubr.bf16.gmra.mrb[0].mxu0 %v918
        %v1034 = vpop.f32.mrb[0].mxu0
        %v1035 = vadd.f32 0.0, %v1034
        %v1036 = vpop.f32.mrb[0].mxu0
        %v1037 = vpop.f32.mrb[0].mxu0
        %v1038 = vadd.f32 0.0, %v1037
        %v1039 = vpop.f32.mrb[0].mxu0
        %1040 = vmatprep.mubr.bf16.mxu0 0
        %1041 = vmatmul.mubr.bf16.gmra.mrb[0].mxu0 %v919
        %v1042 = vpop.f32.mrb[0].mxu0
        %v1043 = vadd.f32 0.0, %v1042
        %v1044 = vpop.f32.mrb[0].mxu0
        %v1045 = vpop.f32.mrb[0].mxu0
        %v1046 = vadd.f32 0.0, %v1045
        %v1047 = vpop.f32.mrb[0].mxu0
        %1048 = vdwg.mxu0
        %v1049 = vadd.f32 %v908, %v1019
        %v1050 = vadd.f32 %v909, %v1022
        %v1051 = vadd.f32 %v910, %v1027
        %v1052 = vadd.f32 %v911, %v1030
        %v1053 = vadd.f32 %v912, %v1035
        %v1054 = vadd.f32 %v913, %v1038
        %v1055 = vadd.f32 %v914, %v1043
        %v1056 = vadd.f32 %v915, %v1046
        %1057 = vst [vmem:[#allocation2] sm:$0xff] %v1049
        %1058 = vst [vmem:[#allocation2 + $0x8] sm:$0xff] %v1050
        %1059 = vst [vmem:[#allocation2 + $0x10] sm:$0xff] %v1051
        %1060 = vst [vmem:[#allocation2 + $0x18] sm:$0xff] %v1052
        %1061 = vst [vmem:[#allocation2 + $0x20] sm:$0xff] %v1053
        %1062 = vst [vmem:[#allocation2 + $0x28] sm:$0xff] %v1054
        %1063 = vst [vmem:[#allocation2 + $0x30] sm:$0xff] %v1055
        %1064 = vst [vmem:[#allocation2 + $0x38] sm:$0xff] %v1056
        %v1065 = vld [vmem:[#allocation2] sm:$0xff]
        %v1066 = vld [vmem:[#allocation2 + $0x8] sm:$0xff]
        %v1067 = vld [vmem:[#allocation2 + $0x10] sm:$0xff]
        %v1068 = vld [vmem:[#allocation2 + $0x18] sm:$0xff]
        %v1069 = vld [vmem:[#allocation2 + $0x20] sm:$0xff]
        %v1070 = vld [vmem:[#allocation2 + $0x28] sm:$0xff]
        %v1071 = vld [vmem:[#allocation2 + $0x30] sm:$0xff]
        %v1072 = vld [vmem:[#allocation2 + $0x38] sm:$0xff]
        %v1073 = vpack.c.bf16 %v1066, %v1065
        %v1074 = vpack.c.bf16 %v1068, %v1067
        %v1075 = vpack.c.bf16 %v1070, %v1069
        %v1076 = vpack.c.bf16 %v1072, %v1071
        %v1081 = vunpack.c.l.b16 %v1073
        %v1082 = vunpack.c.h.b16 %v1073
        %v1083 = vunpack.c.l.b16 %v1074
        %v1084 = vunpack.c.h.b16 %v1074
        %v1085 = vunpack.c.l.b16 %v1075
        %v1086 = vunpack.c.h.b16 %v1075
        %v1087 = vunpack.c.l.b16 %v1076
        %v1088 = vunpack.c.h.b16 %v1076
        %v1089 = vpack.c.b16 %v1081, %v1081
        %v1090 = vpack.c.b16 %v1082, %v1082
        %v1091 = vpack.c.b16 %v1083, %v1083
        %v1092 = vpack.c.b16 %v1084, %v1084
        %v1093 = vpack.c.b16 %v1085, %v1085
        %v1094 = vpack.c.b16 %v1086, %v1086
        %v1095 = vpack.c.b16 %v1087, %v1087
        %v1096 = vpack.c.b16 %v1088, %v1088
        %1105 = vst [vmem:[%s271] sm:$0xf] %v1089
        %1106 = vst [vmem:[%s271 + $0x4] sm:$0xf] %v1090
        %1107 = vst [vmem:[%s271 + $0x8] sm:$0xf] %v1091
        %1108 = vst [vmem:[%s271 + $0xc] sm:$0xf] %v1092
        %1109 = vst [vmem:[%s271 + $0x10] sm:$0xf] %v1093
        %1110 = vst [vmem:[%s271 + $0x14] sm:$0xf] %v1094
        %1111 = vst [vmem:[%s271 + $0x18] sm:$0xf] %v1095
        %1112 = vst [vmem:[%s271 + $0x1c] sm:$0xf] %v1096
        %s1113 = sand.u32 %s141, 1
        %s1114 = scalar_lea.sflag [#allocation5], %s1113
        %s1115 = sand.u32 %s141, 1
        %s1116 = smul.addr %s1115, 32
        %s1117 = scalar_lea.vmem [#allocation9], %s1116
        // Predicated region
        $region53: #{tpu_custom_call.1} parent=39 // pred_check
          %p1118 = pneg %p151
        $region54: #{tpu_custom_call.1} parent=39 // pred_check_branch
          %1120 = sbr.rel (%p1118) target = $region56
        $region55: #{tpu_custom_call.1} parent=39 // pred_region
          %s1121 = smul.u32 8, %s23
          %s1123 = ssub.s32 512, 512
          %1124 = vsyncadd %s1114, %s1123
          %s1125 = smul.addr %s1121, 64
          %s1126 = scalar_lea.hbm %s5, %s1125
          %s1127 = sshll.u32 %s1117, 4
          %s1128 = int_to_ptr.vmem [resolvable:$true] %s1127
          %1133 = dma.vmem_to_hbm [thread:$0]  %s1128, 512, %s1126, %s1114, 64, 64, 4
        $region56: #{tpu_custom_call.1} parent=39 // pred_fallthru
          _
      $region40: #{tpu_custom_call.1} parent=5 // pred_fallthru
        _
      %p1134 = scmp.le.s32.totalorder 2, %s18
      // Predicated region
      $region57: #{tpu_custom_call.1} parent=5 // pred_check
        %p1135 = pneg %p1134
      $region58: #{tpu_custom_call.1} parent=5 // pred_check_branch
        %1137 = sbr.rel (%p1135) target = $region60
      $region59: #{tpu_custom_call.1} parent=5 // pred_region
        %s1138 = ssub.s32 %s18, 2
        // Predicated region
        $region61: #{tpu_custom_call.1} parent=59 // pred_check
          %p1139 = pneg %p157
        $region62: #{tpu_custom_call.1} parent=59 // pred_check_branch
          %1141 = sbr.rel (%p1139) target = $region64
        $region63: #{tpu_custom_call.1} parent=59 // pred_region
          %s1142 = sand.u32 %s142, 1
          %s1143 = scalar_lea.sflag [#allocation5], %s1142
          %s1144 = sand.u32 %s142, 1
          %s1145 = smul.addr %s1144, 32
          %s1146 = scalar_lea.vmem [#allocation9], %s1145
          %1147 = dma.done %s1143, 512
        $region64: #{tpu_custom_call.1} parent=59 // pred_fallthru
          _
      $region60: #{tpu_custom_call.1} parent=5 // pred_fallthru
        _
    $region6: #{tpu_custom_call.1} parent=1 // loop_footer
      %s22 = sadd.s32 1, %s18
    $region7: #{tpu_custom_call.1} parent=1 // loop_footer_branch
      %17 = sbr.rel target = $region3
    $region8: #{tpu_custom_call.1} parent=1 // loop_exit
      _
    %1148 = vsyncpa [#allocation4], 1
    %s1149 = scalar_lea.sflag [#allocation4], 1
    %1150 = vsyncpa %s1149, 1
    %1151 = vsyncpa [#allocation7], 1
    %1152 = vsyncpa [#allocation5], 1
    %s1153 = scalar_lea.sflag [#allocation5], 1
    %1154 = vsyncpa %s1153, 1

// kernel: tpu_custom_call.1
$region0: #{tpu_custom_call.1}
  #allocation0 [shape = 'u32[]', space=smem, size = 0x4, offset = 0x4, fixed_abs, tag = 'smem constant byte address 0x4 - core index']
  #allocation1 [shape = 'u32[144,128]{1,0:T(1,128)}', space=vmem, size = 0x12000, scoped, tag = 'internal scratch']
  #allocation2 [shape = 'f32[64,128]{1,0:T(8,128)}', space=vmem, size = 0x8000, scoped, tag = 'scratch operand']
  %s0 = inlined_call_operand.hbm [shape: bf16[256,128], index: 0, kind: input, shape index: {}]
  %s1 = inlined_call_operand.hbm [shape: bf16[128,256], index: 1, kind: input, shape index: {}]
  %s2 = inlined_call_operand.vmem [shape: bf16[1,256], index: 2, kind: input, shape index: {}]
  %s3 = inlined_call_operand.hbm [shape: bf16[256,128], index: 3, kind: input, shape index: {}]
  %s4 = inlined_call_operand.vmem [shape: bf16[1,128], index: 4, kind: input, shape index: {}]
  %s5 = inlined_call_operand.hbm [shape: bf16[256,128], index: 5, kind: output, shape index: {}]
  %s6 = sld [smem:[#allocation0]]
  $region65: #{tpu_custom_call.1} parent=0
    _
  %s8 = ssub.s32 1, %s6
  %s9 = scalar_select 0, %s8, %s6
  $region1: #{tpu_custom_call.1} parent=0
    #allocation3 [shape = 'u8[32768]{0}', space=vmem, size = 0x8000, scoped, tag = 'input window, operand 0']
    #allocation4 [shape = 's32[2]{0}', space=sflag, size = 0x8, scoped, tag = 'scoped memory for tpu_custom_call.1']
    #allocation5 [shape = 's32[2]{0}', space=sflag, size = 0x8, scoped, tag = 'scoped memory for tpu_custom_call.1']
    #allocation6 [shape = 'u8[65536]{0}', space=vmem, size = 0x10000, scoped, tag = 'input window, operand 1, single buffered']
    #allocation7 [shape = 's32[1]{0}', space=sflag, size = 0x4, scoped, tag = 'scoped memory for tpu_custom_call.1']
    #allocation8 [shape = 'u8[65536]{0}', space=vmem, size = 0x10000, scoped, tag = 'input window, operand 3, single buffered']
    #allocation9 [shape = 'u8[32768]{0}', space=vmem, size = 0x8000, scoped, tag = 'output window, operand 0']
    %10 = vsyncpa [#allocation4], 0
    %s11 = scalar_lea.sflag [#allocation4], 1
    %12 = vsyncpa %s11, 0
    %13 = vsyncpa [#allocation7], 0
    %14 = vsyncpa [#allocation5], 0
    %s15 = scalar_lea.sflag [#allocation5], 1
    %16 = vsyncpa %s15, 0
    loop: start=0, step=1, limit=6
    $region2: #{tpu_custom_call.1} parent=1 // loop_pre_header
      _
    $region3: #{tpu_custom_call.1} parent=1 // loop_header
      %s18 = sphi 0, %s22
      %p19 = scmp.ge.s32.totalorder %s18, 6
      %s28 = sphi 0, %s30
      %s31 = sphi 0, %s28
      %s32 = sphi 0, %s31
      %s48 = sphi 0, %s32
      %s52 = sphi 0, %s52
      %s54 = sphi 0, %s52
      %s55 = sphi 0, %s54
      %s69 = sphi 0, %s55
      %s73 = sphi 0, %s73
      %s75 = sphi 0, %s73
      %s76 = sphi 0, %s75
      %s90 = sphi 0, %s76
      %s94 = sphi 0, %s94
      %s96 = sphi 0, %s94
      %s97 = sphi 0, %s96
      %s111 = sphi 0, %s97
      %s115 = sphi 0, %s115
      %s117 = sphi 0, %s115
      %s118 = sphi 0, %s117
      %s132 = sphi 0, %s118
      %s138 = sphi 0, %s140
      %s141 = sphi 0, %s138
      %s142 = sphi 0, %s141
      %s158 = sphi 0, %s142
    $region4: #{tpu_custom_call.1} parent=1 // loop_header_branch
      %21 = sbr.rel (%p19) target = $region8
    $region5: #{tpu_custom_call.1} parent=1 // loop_body
      %s23 = ssub.s32 %s18, 1
      %s24 = ssub.s32 %s18, 2
      %s25 = sadd.s32 %s18, 1
      %s26 = ssub.s32 %s18, %s25
      %p27 = scmp.eq.s32.totalorder %s26, 0
      %s29 = sadd.s32 %s28, 1
      %s30 = scalar_select %p27, %s28, %s29
      %p33 = pneg %p27
      %p34 = scmp.eq.s32.totalorder %s18, 3
      %p35 = por %p33, %p34
      %p36 = scmp.ne.s32.totalorder %s28, %s31
      %p37 = scmp.eq.s32.totalorder %s18, 0
      %p38 = por %p36, %p37
      %p39 = scmp.ne.s32.totalorder %s28, %s31
      %p40 = scmp.eq.s32.totalorder %s23, 3
      %p41 = por %p39, %p40
      %p42 = scmp.ne.s32.totalorder %s31, %s32
      %p43 = scmp.eq.s32.totalorder %s23, 0
      %p44 = por %p42, %p43
      %p45 = scmp.ne.s32.totalorder %s31, %s32
      %p46 = scmp.eq.s32.totalorder %s24, 3
      %p47 = por %p45, %p46
      %p49 = scmp.ne.s32.totalorder %s32, %s48
      %p50 = scmp.eq.s32.totalorder %s24, 0
      %p51 = por %p49, %p50
      %s53 = sadd.s32 %s52, 1
      %p56 = scmp.eq.s32.totalorder %s18, 3
      %p57 = scmp.ne.s32.totalorder %s52, %s54
      %p58 = scmp.eq.s32.totalorder %s18, 0
      %p59 = por %p57, %p58
      %p60 = scmp.ne.s32.totalorder %s52, %s54
      %p61 = scmp.eq.s32.totalorder %s23, 3
      %p62 = por %p60, %p61
      %p63 = scmp.ne.s32.totalorder %s54, %s55
      %p64 = scmp.eq.s32.totalorder %s23, 0
      %p65 = por %p63, %p64
      %p66 = scmp.ne.s32.totalorder %s54, %s55
      %p67 = scmp.eq.s32.totalorder %s24, 3
      %p68 = por %p66, %p67
      %p70 = scmp.ne.s32.totalorder %s55, %s69
      %p71 = scmp.eq.s32.totalorder %s24, 0
      %p72 = por %p70, %p71
      %s74 = sadd.s32 %s73, 1
      %p77 = scmp.eq.s32.totalorder %s18, 3
      %p78 = scmp.ne.s32.totalorder %s73, %s75
      %p79 = scmp.eq.s32.totalorder %s18, 0
      %p80 = por %p78, %p79
      %p81 = scmp.ne.s32.totalorder %s73, %s75
      %p82 = scmp.eq.s32.totalorder %s23, 3
      %p83 = por %p81, %p82
      %p84 = scmp.ne.s32.totalorder %s75, %s76
      %p85 = scmp.eq.s32.totalorder %s23, 0
      %p86 = por %p84, %p85
      %p87 = scmp.ne.s32.totalorder %s75, %s76
      %p88 = scmp.eq.s32.totalorder %s24, 3
      %p89 = por %p87, %p88
      %p91 = scmp.ne.s32.totalorder %s76, %s90
      %p92 = scmp.eq.s32.totalorder %s24, 0
      %p93 = por %p91, %p92
      %s95 = sadd.s32 %s94, 1
      %p98 = scmp.eq.s32.totalorder %s18, 3
      %p99 = scmp.ne.s32.totalorder %s94, %s96
      %p100 = scmp.eq.s32.totalorder %s18, 0
      %p101 = por %p99, %p100
      %p102 = scmp.ne.s32.totalorder %s94, %s96
      %p103 = scmp.eq.s32.totalorder %s23, 3
      %p104 = por %p102, %p103
      %p105 = scmp.ne.s32.totalorder %s96, %s97
      %p106 = scmp.eq.s32.totalorder %s23, 0
      %p107 = por %p105, %p106
      %p108 = scmp.ne.s32.totalorder %s96, %s97
      %p109 = scmp.eq.s32.totalorder %s24, 3
      %p110 = por %p108, %p109
      %p112 = scmp.ne.s32.totalorder %s97, %s111
      %p113 = scmp.eq.s32.totalorder %s24, 0
      %p114 = por %p112, %p113
      %s116 = sadd.s32 %s115, 1
      %p119 = scmp.eq.s32.totalorder %s18, 3
      %p120 = scmp.ne.s32.totalorder %s115, %s117
      %p121 = scmp.eq.s32.totalorder %s18, 0
      %p122 = por %p120, %p121
      %p123 = scmp.ne.s32.totalorder %s115, %s117
      %p124 = scmp.eq.s32.totalorder %s23, 3
      %p125 = por %p123, %p124
      %p126 = scmp.ne.s32.totalorder %s117, %s118
      %p127 = scmp.eq.s32.totalorder %s23, 0
      %p128 = por %p126, %p127
      %p129 = scmp.ne.s32.totalorder %s117, %s118
      %p130 = scmp.eq.s32.totalorder %s24, 3
      %p131 = por %p129, %p130
      %p133 = scmp.ne.s32.totalorder %s118, %s132
      %p134 = scmp.eq.s32.totalorder %s24, 0
      %p135 = por %p133, %p134
      %s136 = ssub.s32 %s18, %s25
      %p137 = scmp.eq.s32.totalorder %s136, 0
      %s139 = sadd.s32 %s138, 1
      %s140 = scalar_select %p137, %s138, %s139
      %p143 = pneg %p137
      %p144 = scmp.eq.s32.totalorder %s18, 3
      %p145 = por %p143, %p144
      %p146 = scmp.ne.s32.totalorder %s138, %s141
      %p147 = scmp.eq.s32.totalorder %s18, 0
      %p148 = por %p146, %p147
      %p149 = scmp.ne.s32.totalorder %s138, %s141
      %p150 = scmp.eq.s32.totalorder %s23, 3
      %p151 = por %p149, %p150
      %p152 = scmp.ne.s32.totalorder %s141, %s142
      %p153 = scmp.eq.s32.totalorder %s23, 0
      %p154 = por %p152, %p153
      %p155 = scmp.ne.s32.totalorder %s141, %s142
      %p156 = scmp.eq.s32.totalorder %s24, 3
      %p157 = por %p155, %p156
      %p159 = scmp.ne.s32.totalorder %s142, %s158
      %p160 = scmp.eq.s32.totalorder %s24, 0
      %p161 = por %p159, %p160
      %p162 = scmp.le.s32.totalorder 1, %s18
      %p163 = scmp.lt.s32.totalorder %s18, 5
      %p164 = pnand %p162, %p163
      %p165 = pneg %p164
      // Predicated region
      $region9: #{tpu_custom_call.1} parent=5 // pred_check
        _
      $region10: #{tpu_custom_call.1} parent=5 // pred_check_branch
        %167 = sbr.rel (%p164) target = $region12
      $region11: #{tpu_custom_call.1} parent=5 // pred_region
        %s168 = ssub.s32 %s18, 1
        // Predicated region
        $region13: #{tpu_custom_call.1} parent=11 // pred_check
          %p169 = pneg %p65
        $region14: #{tpu_custom_call.1} parent=11 // pred_check_branch
          %171 = sbr.rel (%p169) target = $region16
        $region15: #{tpu_custom_call.1} parent=11 // pred_region
          %s173 = ssub.s32 2048, 2048
          %174 = vsyncadd [#allocation7], %s173
          %s175 = sshll.u32 [#allocation6], 4
          %s176 = int_to_ptr.vmem [resolvable:$true] %s175
          %181 = dma.hbm_to_vmem [thread:$0]  %s1, 2048, %s176, [#allocation7], 128, 128, 8
        $region16: #{tpu_custom_call.1} parent=11 // pred_fallthru
          _
        // Predicated region
        $region17: #{tpu_custom_call.1} parent=11 // pred_check
          %p182 = pneg %p86
        $region18: #{tpu_custom_call.1} parent=11 // pred_check_branch
          %184 = sbr.rel (%p182) target = $region20
        $region19: #{tpu_custom_call.1} parent=11 // pred_region
          _
        $region20: #{tpu_custom_call.1} parent=11 // pred_fallthru
          _
        // Predicated region
        $region21: #{tpu_custom_call.1} parent=11 // pred_check
          %p185 = pneg %p107
        $region22: #{tpu_custom_call.1} parent=11 // pred_check_branch
          %187 = sbr.rel (%p185) target = $region24
        $region23: #{tpu_custom_call.1} parent=11 // pred_region
          %s189 = ssub.s32 2048, 2048
          %190 = vsyncadd [#allocation7], %s189
          %s191 = sshll.u32 [#allocation8], 4
          %s192 = int_to_ptr.vmem [resolvable:$true] %s191
          %197 = dma.hbm_to_vmem [thread:$0]  %s3, 2048, %s192, [#allocation7], 64, 64, 4
        $region24: #{tpu_custom_call.1} parent=11 // pred_fallthru
          _
        // Predicated region
        $region25: #{tpu_custom_call.1} parent=11 // pred_check
          %p198 = pneg %p128
        $region26: #{tpu_custom_call.1} parent=11 // pred_check_branch
          %200 = sbr.rel (%p198) target = $region28
        $region27: #{tpu_custom_call.1} parent=11 // pred_region
          _
        $region28: #{tpu_custom_call.1} parent=11 // pred_fallthru
          _
      $region12: #{tpu_custom_call.1} parent=5 // pred_fallthru
        _
      %p201 = scmp.lt.s32.totalorder %s18, 4
      // Predicated region
      $region29: #{tpu_custom_call.1} parent=5 // pred_check
        %p202 = pneg %p201
      $region30: #{tpu_custom_call.1} parent=5 // pred_check_branch
        %204 = sbr.rel (%p202) target = $region32
      $region31: #{tpu_custom_call.1} parent=5 // pred_region
        // Predicated region
        $region33: #{tpu_custom_call.1} parent=31 // pred_check
          %p205 = pneg %p38
        $region34: #{tpu_custom_call.1} parent=31 // pred_check_branch
          %207 = sbr.rel (%p205) target = $region36
        $region35: #{tpu_custom_call.1} parent=31 // pred_region
          %s208 = sand.u32 %s28, 1
          %s209 = scalar_lea.sflag [#allocation4], %s208
          %s210 = sand.u32 %s28, 1
          %s211 = smul.addr %s210, 32
          %s212 = scalar_lea.vmem [#allocation3], %s211
          %s213 = smul.u32 8, %s18
          %s215 = ssub.s32 512, 512
          %216 = vsyncadd %s209, %s215
          %s217 = smul.addr %s213, 64
          %s218 = scalar_lea.hbm %s0, %s217
          %s219 = sshll.u32 %s212, 4
          %s220 = int_to_ptr.vmem [resolvable:$true] %s219
          %225 = dma.hbm_to_vmem [thread:$0]  %s218, 512, %s220, %s209, 64, 64, 4
        $region36: #{tpu_custom_call.1} parent=31 // pred_fallthru
          _
      $region32: #{tpu_custom_call.1} parent=5 // pred_fallthru
        _
      %p226 = scmp.le.s32.totalorder 1, %s18
      %p227 = scmp.lt.s32.totalorder %s18, 5
      %p228 = pnand %p226, %p227
      %p229 = pneg %p228
      // Predicated region
      $region37: #{tpu_custom_call.1} parent=5 // pred_check
        _
      $region38: #{tpu_custom_call.1} parent=5 // pred_check_branch
        %231 = sbr.rel (%p228) target = $region40
      $region39: #{tpu_custom_call.1} parent=5 // pred_region
        %s232 = ssub.s32 %s18, 1
        %s233 = sand.u32 %s31, 1
        %s234 = scalar_lea.sflag [#allocation4], %s233
        %s235 = sand.u32 %s31, 1
        %s236 = smul.addr %s235, 32
        %s237 = scalar_lea.vmem [#allocation3], %s236
        // Predicated region
        $region41: #{tpu_custom_call.1} parent=39 // pred_check
          %p238 = pneg %p44
        $region42: #{tpu_custom_call.1} parent=39 // pred_check_branch
          %240 = sbr.rel (%p238) target = $region44
        $region43: #{tpu_custom_call.1} parent=39 // pred_region
          %241 = dma.done %s234, 512
        $region44: #{tpu_custom_call.1} parent=39 // pred_fallthru
          _
        // Predicated region
        $region45: #{tpu_custom_call.1} parent=39 // pred_check
          %p242 = pneg %p65
        $region46: #{tpu_custom_call.1} parent=39 // pred_check_branch
          %244 = sbr.rel (%p242) target = $region48
        $region47: #{tpu_custom_call.1} parent=39 // pred_region
          %245 = dma.done [#allocation7], 2048
        $region48: #{tpu_custom_call.1} parent=39 // pred_fallthru
          _
        // Predicated region
        $region49: #{tpu_custom_call.1} parent=39 // pred_check
          %p246 = pneg %p107
        $region50: #{tpu_custom_call.1} parent=39 // pred_check_branch
          %248 = sbr.rel (%p246) target = $region52
        $region51: #{tpu_custom_call.1} parent=39 // pred_region
          %249 = dma.done [#allocation7], 2048
        $region52: #{tpu_custom_call.1} parent=39 // pred_fallthru
          _
        %s250 = sand.u32 %s31, 1
        %s251 = scalar_lea.sflag [#allocation4], %s250
        %s252 = sand.u32 %s31, 1
        %s253 = smul.addr %s252, 32
        %s254 = scalar_lea.vmem [#allocation3], %s253
        %p255 = pneg %p44
        %p256 = pneg %p41
        %p257 = pneg %p65
        %p258 = pneg %p62
        %p259 = pneg %p86
        %p260 = pneg %p83
        %p261 = pneg %p107
        %p262 = pneg %p104
        %p263 = pneg %p128
        %p264 = pneg %p125
        %p265 = pneg %p154
        %p266 = pneg %p151
        %s267 = sand.u32 %s141, 1
        %s268 = scalar_lea.sflag [#allocation5], %s267
        %s269 = sand.u32 %s141, 1
        %s270 = smul.addr %s269, 32
        %s271 = scalar_lea.vmem [#allocation9], %s270
        %s272 = smul.u32 8, %s23
        %s273 = smul.u32 8, %s23
        %v275 = vld [vmem:[%s237] sm:$0xf]
        %v276 = vld [vmem:[%s237 + $0x4] sm:$0xf]
        %v277 = vld [vmem:[%s237 + $0x8] sm:$0xf]
        %v278 = vld [vmem:[%s237 + $0xc] sm:$0xf]
        %v279 = vld [vmem:[%s237 + $0x10] sm:$0xf]
        %v280 = vld [vmem:[%s237 + $0x14] sm:$0xf]
        %v281 = vld [vmem:[%s237 + $0x18] sm:$0xf]
        %v282 = vld [vmem:[%s237 + $0x1c] sm:$0xf]
        %v283 = vunpack.c.l.bf16 %v275
        %v284 = vunpack.c.l.bf16 %v276
        %v285 = vunpack.c.l.bf16 %v277
        %v286 = vunpack.c.l.bf16 %v278
        %v287 = vunpack.c.l.bf16 %v279
        %v288 = vunpack.c.l.bf16 %v280
        %v289 = vunpack.c.l.bf16 %v281
        %v290 = vunpack.c.l.bf16 %v282
        %v291 = vld [vmem:[%s4] sm:$0x1]
        %v292 = vunpack.c.l.bf16 %v291
        %v293 = vlaneseq
        %v294 = vshrl.u32 %v293, 7
        %v295 = vsub.s32 0, %v294
        %v296 = vrot.slane %v292, %v295
        %v297 = vadd.f32 %v283, %v296
        %v298 = vadd.f32 %v284, %v296
        %v299 = vadd.f32 %v285, %v296
        %v300 = vadd.f32 %v286, %v296
        %v301 = vadd.f32 %v287, %v296
        %v302 = vadd.f32 %v288, %v296
        %v303 = vadd.f32 %v289, %v296
        %v304 = vadd.f32 %v290, %v296
        %305 = vst [vmem:[#allocation2] sm:$0xff] %v297
        %306 = vst [vmem:[#allocation2 + $0x8] sm:$0xff] %v298
        %307 = vst [vmem:[#allocation2 + $0x10] sm:$0xff] %v299
        %308 = vst [vmem:[#allocation2 + $0x18] sm:$0xff] %v300
        %309 = vst [vmem:[#allocation2 + $0x20] sm:$0xff] %v301
        %310 = vst [vmem:[#allocation2 + $0x28] sm:$0xff] %v302
        %311 = vst [vmem:[#allocation2 + $0x30] sm:$0xff] %v303
        %312 = vst [vmem:[#allocation2 + $0x38] sm:$0xff] %v304
        %v313 = vld [vmem:[#allocation6] sm:$0xf]
        %v314 = vld [vmem:[#allocation6 + $0x8] sm:$0xf]
        %v315 = vld [vmem:[#allocation6 + $0x10] sm:$0xf]
        %v316 = vld [vmem:[#allocation6 + $0x18] sm:$0xf]
        %v317 = vld [vmem:[#allocation6 + $0x20] sm:$0xf]
        %v318 = vld [vmem:[#allocation6 + $0x28] sm:$0xf]
        %v319 = vld [vmem:[#allocation6 + $0x30] sm:$0xf]
        %v320 = vld [vmem:[#allocation6 + $0x38] sm:$0xf]
        %v321 = vld [vmem:[#allocation6 + $0x40] sm:$0xf]
        %v322 = vld [vmem:[#allocation6 + $0x48] sm:$0xf]
        %v323 = vld [vmem:[#allocation6 + $0x50] sm:$0xf]
        %v324 = vld [vmem:[#allocation6 + $0x58] sm:$0xf]
        %v325 = vld [vmem:[#allocation6 + $0x60] sm:$0xf]
        %v326 = vld [vmem:[#allocation6 + $0x68] sm:$0xf]
        %v327 = vld [vmem:[#allocation6 + $0x70] sm:$0xf]
        %v328 = vld [vmem:[#allocation6 + $0x78] sm:$0xf]
        %v329 = vld [vmem:[%s2] sm:$0x1]
        %v330 = vunpack.c.l.bf16 %v329
        %v331 = vlaneseq
        %v332 = vshrl.u32 %v331, 7
        %v333 = vsub.s32 0, %v332
        %v334 = vrot.slane %v330, %v333
        %v343 = vunpack.c.l.b16 %v275
        %v344 = vunpack.c.l.b16 %v276
        %v345 = vunpack.c.l.b16 %v277
        %v346 = vunpack.c.l.b16 %v278
        %v347 = vunpack.c.l.b16 %v279
        %v348 = vunpack.c.l.b16 %v280
        %v349 = vunpack.c.l.b16 %v281
        %v350 = vunpack.c.l.b16 %v282
        %v351 = vpack.c.b16 %v344, %v343
        %v352 = vpack.c.b16 %v346, %v345
        %v353 = vpack.c.b16 %v348, %v347
        %v354 = vpack.c.b16 %v350, %v349
        %v375 = vunpack.c.l.b16 %v313
        %v376 = vunpack.c.l.b16 %v314
        %v377 = vunpack.c.l.b16 %v315
        %v378 = vunpack.c.l.b16 %v316
        %v379 = vunpack.c.l.b16 %v317
        %v380 = vunpack.c.l.b16 %v318
        %v381 = vunpack.c.l.b16 %v319
        %v382 = vunpack.c.l.b16 %v320
        %v383 = vunpack.c.l.b16 %v321
        %v384 = vunpack.c.l.b16 %v322
        %v385 = vunpack.c.l.b16 %v323
        %v386 = vunpack.c.l.b16 %v324
        %v387 = vunpack.c.l.b16 %v325
        %v388 = vunpack.c.l.b16 %v326
        %v389 = vunpack.c.l.b16 %v327
        %v390 = vunpack.c.l.b16 %v328
        %v391 = vpack.c.b16 %v376, %v375
        %v392 = vpack.c.b16 %v378, %v377
        %v393 = vpack.c.b16 %v380, %v379
        %v394 = vpack.c.b16 %v382, %v381
        %v395 = vpack.c.b16 %v384, %v383
        %v396 = vpack.c.b16 %v386, %v385
        %v397 = vpack.c.b16 %v388, %v387
        %v398 = vpack.c.b16 %v390, %v389
        %407 = vmatprep.subr.bf16.mxu0 0
        %408 = vmatpush1.bf16.msra.mxu0 %v391
        %409 = vmatprep.subr.bf16.mxu0 0
        %410 = vmatpush1.bf16.msra.mxu0 %v392
        %411 = vmatprep.subr.bf16.mxu0 0
        %412 = vmatpush1.bf16.msra.mxu0 %v393
        %413 = vmatprep.subr.bf16.mxu0 0
        %414 = vmatpush1.bf16.msra.mxu0 %v394
        %415 = vmatprep.subr.bf16.mxu0 0
        %416 = vmatpush1.bf16.msra.mxu0 %v395
        %417 = vmatprep.subr.bf16.mxu0 0
        %418 = vmatpush1.bf16.msra.mxu0 %v396
        %419 = vmatprep.subr.bf16.mxu0 0
        %420 = vmatpush1.bf16.msra.mxu0 %v397
        %421 = vmatprep.subr.bf16.mxu0 0
        %422 = vmatpush1.bf16.msra.mxu0 %v398
        %423 = vmatprep.subr.bf16.mxu0 0
        %424 = vmatpush1.bf16.msra.mxu0 0
        %425 = vmatprep.subr.bf16.mxu0 0
        %426 = vmatpush1.bf16.msra.mxu0 0
        %427 = vmatprep.subr.bf16.mxu0 0
        %428 = vmatpush1.bf16.msra.mxu0 0
        %429 = vmatprep.subr.bf16.mxu0 0
        %430 = vmatpush1.bf16.msra.mxu0 0
        %431 = vmatprep.subr.bf16.mxu0 0
        %432 = vmatpush1.bf16.msra.mxu0 0
        %433 = vmatprep.subr.bf16.mxu0 0
        %434 = vmatpush1.bf16.msra.mxu0 0
        %435 = vmatprep.subr.bf16.mxu0 0
        %436 = vmatpush1.bf16.msra.mxu0 0
        %437 = vmatprep.subr.bf16.mxu0 0
        %438 = vmatpush1.bf16.msra.mxu0 0
        %439 = vmatprep.mubr.bf16.mxu0 0
        %440 = vmatmul.mubr.bf16.gmra.mrb[0].mxu0 %v351
        %v441 = vpop.f32.mrb[0].mxu0
        %v442 = vadd.f32 %v334, %v441
        %v443 = vpop.f32.mrb[0].mxu0
        %v444 = vpop.f32.mrb[0].mxu0
        %v445 = vadd.f32 %v334, %v444
        %v446 = vpop.f32.mrb[0].mxu0
        %447 = vmatprep.mubr.bf16.mxu0 0
        %448 = vmatmul.mubr.bf16.gmra.mrb[0].mxu0 %v352
        %v449 = vpop.f32.mrb[0].mxu0
        %v450 = vadd.f32 %v334, %v449
        %v451 = vpop.f32.mrb[0].mxu0
        %v452 = vpop.f32.mrb[0].mxu0
        %v453 = vadd.f32 %v334, %v452
        %v454 = vpop.f32.mrb[0].mxu0
        %455 = vmatprep.mubr.bf16.mxu0 0
        %456 = vmatmul.mubr.bf16.gmra.mrb[0].mxu0 %v353
        %v457 = vpop.f32.mrb[0].mxu0
        %v458 = vadd.f32 %v334, %v457
        %v459 = vpop.f32.mrb[0].mxu0
        %v460 = vpop.f32.mrb[0].mxu0
        %v461 = vadd.f32 %v334, %v460
        %v462 = vpop.f32.mrb[0].mxu0
        %463 = vmatprep.mubr.bf16.mxu0 0
        %464 = vmatmul.mubr.bf16.gmra.mrb[0].mxu0 %v354
        %v465 = vpop.f32.mrb[0].mxu0
        %v466 = vadd.f32 %v334, %v465
        %v467 = vpop.f32.mrb[0].mxu0
        %v468 = vpop.f32.mrb[0].mxu0
        %v469 = vadd.f32 %v334, %v468
        %v470 = vpop.f32.mrb[0].mxu0
        %471 = vdwg.mxu0
        %v472 = vmul.f32 %v442, 0.5
        %v473 = vmul.f32 %v445, 0.5
        %v474 = vmul.f32 %v450, 0.5
        %v475 = vmul.f32 %v453, 0.5
        %v476 = vmul.f32 %v458, 0.5
        %v477 = vmul.f32 %v461, 0.5
        %v478 = vmul.f32 %v466, 0.5
        %v479 = vmul.f32 %v469, 0.5
        %v480 = vmul.f32 %v442, 0.044715
        %v481 = vmul.f32 %v445, 0.044715
        %v482 = vmul.f32 %v450, 0.044715
        %v483 = vmul.f32 %v453, 0.044715
        %v484 = vmul.f32 %v458, 0.044715
        %v485 = vmul.f32 %v461, 0.044715
        %v486 = vmul.f32 %v466, 0.044715
        %v487 = vmul.f32 %v469, 0.044715
        %v488 = vmul.f32 %v480, %v442
        %v489 = vmul.f32 %v481, %v445
        %v490 = vmul.f32 %v482, %v450
        %v491 = vmul.f32 %v483, %v453
        %v492 = vmul.f32 %v484, %v458
        %v493 = vmul.f32 %v485, %v461
        %v494 = vmul.f32 %v486, %v466
        %v495 = vmul.f32 %v487, %v469
        %v496 = vmul.f32 %v488, %v442
        %v497 = vmul.f32 %v489, %v445
        %v498 = vmul.f32 %v490, %v450
        %v499 = vmul.f32 %v491, %v453
        %v500 = vmul.f32 %v492, %v458
        %v501 = vmul.f32 %v493, %v461
        %v502 = vmul.f32 %v494, %v466
        %v503 = vmul.f32 %v495, %v469
        %v504 = vadd.f32 %v442, %v496
        %v505 = vadd.f32 %v445, %v497
        %v506 = vadd.f32 %v450, %v498
        %v507 = vadd.f32 %v453, %v499
        %v508 = vadd.f32 %v458, %v500
        %v509 = vadd.f32 %v461, %v501
        %v510 = vadd.f32 %v466, %v502
        %v511 = vadd.f32 %v469, %v503
        %v512 = vmul.f32 %v504, 0.7978846
        %v513 = vmul.f32 %v505, 0.7978846
        %v514 = vmul.f32 %v506, 0.7978846
        %v515 = vmul.f32 %v507, 0.7978846
        %v516 = vmul.f32 %v508, 0.7978846
        %v517 = vmul.f32 %v509, 0.7978846
        %v518 = vmul.f32 %v510, 0.7978846
        %v519 = vmul.f32 %v511, 0.7978846
        %v520 = vtanh.pop %v512
        %v521 = vtanh.pop %v513
        %v522 = vtanh.pop %v514
        %v523 = vtanh.pop %v515
        %v524 = vtanh.pop %v516
        %v525 = vtanh.pop %v517
        %v526 = vtanh.pop %v518
        %v527 = vtanh.pop %v519
        %v528 = vadd.f32 %v520, 1.0
        %v529 = vadd.f32 %v521, 1.0
        %v530 = vadd.f32 %v522, 1.0
        %v531 = vadd.f32 %v523, 1.0
        %v532 = vadd.f32 %v524, 1.0
        %v533 = vadd.f32 %v525, 1.0
        %v534 = vadd.f32 %v526, 1.0
        %v535 = vadd.f32 %v527, 1.0
        %v536 = vmul.f32 %v472, %v528
        %v537 = vmul.f32 %v473, %v529
        %v538 = vmul.f32 %v474, %v530
        %v539 = vmul.f32 %v475, %v531
        %v540 = vmul.f32 %v476, %v532
        %v541 = vmul.f32 %v477, %v533
        %v542 = vmul.f32 %v478, %v534
        %v543 = vmul.f32 %v479, %v535
        %v544 = vld [vmem:[#allocation2] sm:$0xff]
        %v545 = vld [vmem:[#allocation2 + $0x8] sm:$0xff]
        %v546 = vld [vmem:[#allocation2 + $0x10] sm:$0xff]
        %v547 = vld [vmem:[#allocation2 + $0x18] sm:$0xff]
        %v548 = vld [vmem:[#allocation2 + $0x20] sm:$0xff]
        %v549 = vld [vmem:[#allocation2 + $0x28] sm:$0xff]
        %v550 = vld [vmem:[#allocation2 + $0x30] sm:$0xff]
        %v551 = vld [vmem:[#allocation2 + $0x38] sm:$0xff]
        %v552 = vpack.c.bf16 %v537, %v536
        %v553 = vpack.c.bf16 %v539, %v538
        %v554 = vpack.c.bf16 %v541, %v540
        %v555 = vpack.c.bf16 %v543, %v542
        %v556 = vld [vmem:[#allocation8] sm:$0xf]
        %v557 = vld [vmem:[#allocation8 + $0x4] sm:$0xf]
        %v558 = vld [vmem:[#allocation8 + $0x8] sm:$0xf]
        %v559 = vld [vmem:[#allocation8 + $0xc] sm:$0xf]
        %v560 = vld [vmem:[#allocation8 + $0x10] sm:$0xf]
        %v561 = vld [vmem:[#allocation8 + $0x14] sm:$0xf]
        %v562 = vld [vmem:[#allocation8 + $0x18] sm:$0xf]
        %v563 = vld [vmem:[#allocation8 + $0x1c] sm:$0xf]
        %v564 = vld [vmem:[#allocation8 + $0x20] sm:$0xf]
        %v565 = vld [vmem:[#allocation8 + $0x24] sm:$0xf]
        %v566 = vld [vmem:[#allocation8 + $0x28] sm:$0xf]
        %v567 = vld [vmem:[#allocation8 + $0x2c] sm:$0xf]
        %v568 = vld [vmem:[#allocation8 + $0x30] sm:$0xf]
        %v569 = vld [vmem:[#allocation8 + $0x34] sm:$0xf]
        %v570 = vld [vmem:[#allocation8 + $0x38] sm:$0xf]
        %v571 = vld [vmem:[#allocation8 + $0x3c] sm:$0xf]
        %v588 = vunpack.c.l.b16 %v556
        %v589 = vunpack.c.l.b16 %v557
        %v590 = vunpack.c.l.b16 %v558
        %v591 = vunpack.c.l.b16 %v559
        %v592 = vunpack.c.l.b16 %v560
        %v593 = vunpack.c.l.b16 %v561
        %v594 = vunpack.c.l.b16 %v562
        %v595 = vunpack.c.l.b16 %v563
        %v596 = vunpack.c.l.b16 %v564
        %v597 = vunpack.c.l.b16 %v565
        %v598 = vunpack.c.l.b16 %v566
        %v599 = vunpack.c.l.b16 %v567
        %v600 = vunpack.c.l.b16 %v568
        %v601 = vunpack.c.l.b16 %v569
        %v602 = vunpack.c.l.b16 %v570
        %v603 = vunpack.c.l.b16 %v571
        %v604 = vpack.c.b16 %v589, %v588
        %v605 = vpack.c.b16 %v591, %v590
        %v606 = vpack.c.b16 %v593, %v592
        %v607 = vpack.c.b16 %v595, %v594
        %v608 = vpack.c.b16 %v597, %v596
        %v609 = vpack.c.b16 %v599, %v598
        %v610 = vpack.c.b16 %v601, %v600
        %v611 = vpack.c.b16 %v603, %v602
        %620 = vmatprep.subr.bf16.mxu0 0
        %621 = vmatpush1.bf16.msra.mxu0 %v604
        %622 = vmatprep.subr.bf16.mxu0 0
        %623 = vmatpush1.bf16.msra.mxu0 %v605
        %624 = vmatprep.subr.bf16.mxu0 0
        %625 = vmatpush1.bf16.msra.mxu0 %v606
        %626 = vmatprep.subr.bf16.mxu0 0
        %627 = vmatpush1.bf16.msra.mxu0 %v607
        %628 = vmatprep.subr.bf16.mxu0 0
        %629 = vmatpush1.bf16.msra.mxu0 %v608
        %630 = vmatprep.subr.bf16.mxu0 0
        %631 = vmatpush1.bf16.msra.mxu0 %v609
        %632 = vmatprep.subr.bf16.mxu0 0
        %633 = vmatpush1.bf16.msra.mxu0 %v610
        %634 = vmatprep.subr.bf16.mxu0 0
        %635 = vmatpush1.bf16.msra.mxu0 %v611
        %636 = vmatprep.subr.bf16.mxu0 0
        %637 = vmatpush1.bf16.msra.mxu0 0
        %638 = vmatprep.subr.bf16.mxu0 0
        %639 = vmatpush1.bf16.msra.mxu0 0
        %640 = vmatprep.subr.bf16.mxu0 0
        %641 = vmatpush1.bf16.msra.mxu0 0
        %642 = vmatprep.subr.bf16.mxu0 0
        %643 = vmatpush1.bf16.msra.mxu0 0
        %644 = vmatprep.subr.bf16.mxu0 0
        %645 = vmatpush1.bf16.msra.mxu0 0
        %646 = vmatprep.subr.bf16.mxu0 0
        %647 = vmatpush1.bf16.msra.mxu0 0
        %648 = vmatprep.subr.bf16.mxu0 0
        %649 = vmatpush1.bf16.msra.mxu0 0
        %650 = vmatprep.subr.bf16.mxu0 0
        %651 = vmatpush1.bf16.msra.mxu0 0
        %652 = vmatprep.mubr.bf16.mxu0 0
        %653 = vmatmul.mubr.bf16.gmra.mrb[0].mxu0 %v552
        %v654 = vpop.f32.mrb[0].mxu0
        %v655 = vadd.f32 0.0, %v654
        %v656 = vpop.f32.mrb[0].mxu0
        %v657 = vpop.f32.mrb[0].mxu0
        %v658 = vadd.f32 0.0, %v657
        %v659 = vpop.f32.mrb[0].mxu0
        %660 = vmatprep.mubr.bf16.mxu0 0
        %661 = vmatmul.mubr.bf16.gmra.mrb[0].mxu0 %v553
        %v662 = vpop.f32.mrb[0].mxu0
        %v663 = vadd.f32 0.0, %v662
        %v664 = vpop.f32.mrb[0].mxu0
        %v665 = vpop.f32.mrb[0].mxu0
        %v666 = vadd.f32 0.0, %v665
        %v667 = vpop.f32.mrb[0].mxu0
        %668 = vmatprep.mubr.bf16.mxu0 0
        %669 = vmatmul.mubr.bf16.gmra.mrb[0].mxu0 %v554
        %v670 = vpop.f32.mrb[0].mxu0
        %v671 = vadd.f32 0.0, %v670
        %v672 = vpop.f32.mrb[0].mxu0
        %v673 = vpop.f32.mrb[0].mxu0
        %v674 = vadd.f32 0.0, %v673
        %v675 = vpop.f32.mrb[0].mxu0
        %676 = vmatprep.mubr.bf16.mxu0 0
        %677 = vmatmul.mubr.bf16.gmra.mrb[0].mxu0 %v555
        %v678 = vpop.f32.mrb[0].mxu0
        %v679 = vadd.f32 0.0, %v678
        %v680 = vpop.f32.mrb[0].mxu0
        %v681 = vpop.f32.mrb[0].mxu0
        %v682 = vadd.f32 0.0, %v681
        %v683 = vpop.f32.mrb[0].mxu0
        %684 = vdwg.mxu0
        %v685 = vadd.f32 %v544, %v655
        %v686 = vadd.f32 %v545, %v658
        %v687 = vadd.f32 %v546, %v663
        %v688 = vadd.f32 %v547, %v666
        %v689 = vadd.f32 %v548, %v671
        %v690 = vadd.f32 %v549, %v674
        %v691 = vadd.f32 %v550, %v679
        %v692 = vadd.f32 %v551, %v682
        %693 = vst [vmem:[#allocation2] sm:$0xff] %v685
        %694 = vst [vmem:[#allocation2 + $0x8] sm:$0xff] %v686
        %695 = vst [vmem:[#allocation2 + $0x10] sm:$0xff] %v687
        %696 = vst [vmem:[#allocation2 + $0x18] sm:$0xff] %v688
        %697 = vst [vmem:[#allocation2 + $0x20] sm:$0xff] %v689
        %698 = vst [vmem:[#allocation2 + $0x28] sm:$0xff] %v690
        %699 = vst [vmem:[#allocation2 + $0x30] sm:$0xff] %v691
        %700 = vst [vmem:[#allocation2 + $0x38] sm:$0xff] %v692
        %v701 = vld [vmem:[#allocation6 + $0x4] sm:$0xf]
        %v702 = vld [vmem:[#allocation6 + $0xc] sm:$0xf]
        %v703 = vld [vmem:[#allocation6 + $0x14] sm:$0xf]
        %v704 = vld [vmem:[#allocation6 + $0x1c] sm:$0xf]
        %v705 = vld [vmem:[#allocation6 + $0x24] sm:$0xf]
        %v706 = vld [vmem:[#allocation6 + $0x2c] sm:$0xf]
        %v707 = vld [vmem:[#allocation6 + $0x34] sm:$0xf]
        %v708 = vld [vmem:[#allocation6 + $0x3c] sm:$0xf]
        %v709 = vld [vmem:[#allocation6 + $0x44] sm:$0xf]
        %v710 = vld [vmem:[#allocation6 + $0x4c] sm:$0xf]
        %v711 = vld [vmem:[#allocation6 + $0x54] sm:$0xf]
        %v712 = vld [vmem:[#allocation6 + $0x5c] sm:$0xf]
        %v713 = vld [vmem:[#allocation6 + $0x64] sm:$0xf]
        %v714 = vld [vmem:[#allocation6 + $0x6c] sm:$0xf]
        %v715 = vld [vmem:[#allocation6 + $0x74] sm:$0xf]
        %v716 = vld [vmem:[#allocation6 + $0x7c] sm:$0xf]
        %v717 = vld [vmem:[%s2 + $0x1] sm:$0x1]
        %v718 = vunpack.c.l.bf16 %v717
        %v719 = vlaneseq
        %v720 = vshrl.u32 %v719, 7
        %v721 = vsub.s32 0, %v720
        %v722 = vrot.slane %v718, %v721
        %v739 = vunpack.c.l.b16 %v701
        %v740 = vunpack.c.l.b16 %v702
        %v741 = vunpack.c.l.b16 %v703
        %v742 = vunpack.c.l.b16 %v704
        %v743 = vunpack.c.l.b16 %v705
        %v744 = vunpack.c.l.b16 %v706
        %v745 = vunpack.c.l.b16 %v707
        %v746 = vunpack.c.l.b16 %v708
        %v747 = vunpack.c.l.b16 %v709
        %v748 = vunpack.c.l.b16 %v710
        %v749 = vunpack.c.l.b16 %v711
        %v750 = vunpack.c.l.b16 %v712
        %v751 = vunpack.c.l.b16 %v713
        %v752 = vunpack.c.l.b16 %v714
        %v753 = vunpack.c.l.b16 %v715
        %v754 = vunpack.c.l.b16 %v716
        %v755 = vpack.c.b16 %v740, %v739
        %v756 = vpack.c.b16 %v742, %v741
        %v757 = vpack.c.b16 %v744, %v743
        %v758 = vpack.c.b16 %v746, %v745
        %v759 = vpack.c.b16 %v748, %v747
        %v760 = vpack.c.b16 %v750, %v749
        %v761 = vpack.c.b16 %v752, %v751
        %v762 = vpack.c.b16 %v754, %v753
        %771 = vmatprep.subr.bf16.mxu0 0
        %772 = vmatpush1.bf16.msra.mxu0 %v755
        %773 = vmatprep.subr.bf16.mxu0 0
        %774 = vmatpush1.bf16.msra.mxu0 %v756
        %775 = vmatprep.subr.bf16.mxu0 0
        %776 = vmatpush1.bf16.msra.mxu0 %v757
        %777 = vmatprep.subr.bf16.mxu0 0
        %778 = vmatpush1.bf16.msra.mxu0 %v758
        %779 = vmatprep.subr.bf16.mxu0 0
        %780 = vmatpush1.bf16.msra.mxu0 %v759
        %781 = vmatprep.subr.bf16.mxu0 0
        %782 = vmatpush1.bf16.msra.mxu0 %v760
        %783 = vmatprep.subr.bf16.mxu0 0
        %784 = vmatpush1.bf16.msra.mxu0 %v761
        %785 = vmatprep.subr.bf16.mxu0 0
        %786 = vmatpush1.bf16.msra.mxu0 %v762
        %787 = vmatprep.subr.bf16.mxu0 0
        %788 = vmatpush1.bf16.msra.mxu0 0
        %789 = vmatprep.subr.bf16.mxu0 0
        %790 = vmatpush1.bf16.msra.mxu0 0
        %791 = vmatprep.subr.bf16.mxu0 0
        %792 = vmatpush1.bf16.msra.mxu0 0
        %793 = vmatprep.subr.bf16.mxu0 0
        %794 = vmatpush1.bf16.msra.mxu0 0
        %795 = vmatprep.subr.bf16.mxu0 0
        %796 = vmatpush1.bf16.msra.mxu0 0
        %797 = vmatprep.subr.bf16.mxu0 0
        %798 = vmatpush1.bf16.msra.mxu0 0
        %799 = vmatprep.subr.bf16.mxu0 0
        %800 = vmatpush1.bf16.msra.mxu0 0
        %801 = vmatprep.subr.bf16.mxu0 0
        %802 = vmatpush1.bf16.msra.mxu0 0
        %803 = vmatprep.mubr.bf16.mxu0 0
        %804 = vmatmul.mubr.bf16.gmra.mrb[0].mxu0 %v351
        %v805 = vpop.f32.mrb[0].mxu0
        %v806 = vadd.f32 %v722, %v805
        %v807 = vpop.f32.mrb[0].mxu0
        %v808 = vpop.f32.mrb[0].mxu0
        %v809 = vadd.f32 %v722, %v808
        %v810 = vpop.f32.mrb[0].mxu0
        %811 = vmatprep.mubr.bf16.mxu0 0
        %812 = vmatmul.mubr.bf16.gmra.mrb[0].mxu0 %v352
        %v813 = vpop.f32.mrb[0].mxu0
        %v814 = vadd.f32 %v722, %v813
        %v815 = vpop.f32.mrb[0].mxu0
        %v816 = vpop.f32.mrb[0].mxu0
        %v817 = vadd.f32 %v722, %v816
        %v818 = vpop.f32.mrb[0].mxu0
        %819 = vmatprep.mubr.bf16.mxu0 0
        %820 = vmatmul.mubr.bf16.gmra.mrb[0].mxu0 %v353
        %v821 = vpop.f32.mrb[0].mxu0
        %v822 = vadd.f32 %v722, %v821
        %v823 = vpop.f32.mrb[0].mxu0
        %v824 = vpop.f32.mrb[0].mxu0
        %v825 = vadd.f32 %v722, %v824
        %v826 = vpop.f32.mrb[0].mxu0
        %827 = vmatprep.mubr.bf16.mxu0 0
        %828 = vmatmul.mubr.bf16.gmra.mrb[0].mxu0 %v354
        %v829 = vpop.f32.mrb[0].mxu0
        %v830 = vadd.f32 %v722, %v829
        %v831 = vpop.f32.mrb[0].mxu0
        %v832 = vpop.f32.mrb[0].mxu0
        %v833 = vadd.f32 %v722, %v832
        %v834 = vpop.f32.mrb[0].mxu0
        %835 = vdwg.mxu0
        %v836 = vmul.f32 %v806, 0.5
        %v837 = vmul.f32 %v809, 0.5
        %v838 = vmul.f32 %v814, 0.5
        %v839 = vmul.f32 %v817, 0.5
        %v840 = vmul.f32 %v822, 0.5
        %v841 = vmul.f32 %v825, 0.5
        %v842 = vmul.f32 %v830, 0.5
        %v843 = vmul.f32 %v833, 0.5
        %v844 = vmul.f32 %v806, 0.044715
        %v845 = vmul.f32 %v809, 0.044715
        %v846 = vmul.f32 %v814, 0.044715
        %v847 = vmul.f32 %v817, 0.044715
        %v848 = vmul.f32 %v822, 0.044715
        %v849 = vmul.f32 %v825, 0.044715
        %v850 = vmul.f32 %v830, 0.044715
        %v851 = vmul.f32 %v833, 0.044715
        %v852 = vmul.f32 %v844, %v806
        %v853 = vmul.f32 %v845, %v809
        %v854 = vmul.f32 %v846, %v814
        %v855 = vmul.f32 %v847, %v817
        %v856 = vmul.f32 %v848, %v822
        %v857 = vmul.f32 %v849, %v825
        %v858 = vmul.f32 %v850, %v830
        %v859 = vmul.f32 %v851, %v833
        %v860 = vmul.f32 %v852, %v806
        %v861 = vmul.f32 %v853, %v809
        %v862 = vmul.f32 %v854, %v814
        %v863 = vmul.f32 %v855, %v817
        %v864 = vmul.f32 %v856, %v822
        %v865 = vmul.f32 %v857, %v825
        %v866 = vmul.f32 %v858, %v830
        %v867 = vmul.f32 %v859, %v833
        %v868 = vadd.f32 %v806, %v860
        %v869 = vadd.f32 %v809, %v861
        %v870 = vadd.f32 %v814, %v862
        %v871 = vadd.f32 %v817, %v863
        %v872 = vadd.f32 %v822, %v864
        %v873 = vadd.f32 %v825, %v865
        %v874 = vadd.f32 %v830, %v866
        %v875 = vadd.f32 %v833, %v867
        %v876 = vmul.f32 %v868, 0.7978846
        %v877 = vmul.f32 %v869, 0.7978846
        %v878 = vmul.f32 %v870, 0.7978846
        %v879 = vmul.f32 %v871, 0.7978846
        %v880 = vmul.f32 %v872, 0.7978846
        %v881 = vmul.f32 %v873, 0.7978846
        %v882 = vmul.f32 %v874, 0.7978846
        %v883 = vmul.f32 %v875, 0.7978846
        %v884 = vtanh.pop %v876
        %v885 = vtanh.pop %v877
        %v886 = vtanh.pop %v878
        %v887 = vtanh.pop %v879
        %v888 = vtanh.pop %v880
        %v889 = vtanh.pop %v881
        %v890 = vtanh.pop %v882
        %v891 = vtanh.pop %v883
        %v892 = vadd.f32 %v884, 1.0
        %v893 = vadd.f32 %v885, 1.0
        %v894 = vadd.f32 %v886, 1.0
        %v895 = vadd.f32 %v887, 1.0
        %v896 = vadd.f32 %v888, 1.0
        %v897 = vadd.f32 %v889, 1.0
        %v898 = vadd.f32 %v890, 1.0
        %v899 = vadd.f32 %v891, 1.0
        %v900 = vmul.f32 %v836, %v892
        %v901 = vmul.f32 %v837, %v893
        %v902 = vmul.f32 %v838, %v894
        %v903 = vmul.f32 %v839, %v895
        %v904 = vmul.f32 %v840, %v896
        %v905 = vmul.f32 %v841, %v897
        %v906 = vmul.f32 %v842, %v898
        %v907 = vmul.f32 %v843, %v899
        %v908 = vld [vmem:[#allocation2] sm:$0xff]
        %v909 = vld [vmem:[#allocation2 + $0x8] sm:$0xff]
        %v910 = vld [vmem:[#allocation2 + $0x10] sm:$0xff]
        %v911 = vld [vmem:[#allocation2 + $0x18] sm:$0xff]
        %v912 = vld [vmem:[#allocation2 + $0x20] sm:$0xff]
        %v913 = vld [vmem:[#allocation2 + $0x28] sm:$0xff]
        %v914 = vld [vmem:[#allocation2 + $0x30] sm:$0xff]
        %v915 = vld [vmem:[#allocation2 + $0x38] sm:$0xff]
        %v916 = vpack.c.bf16 %v901, %v900
        %v917 = vpack.c.bf16 %v903, %v902
        %v918 = vpack.c.bf16 %v905, %v904
        %v919 = vpack.c.bf16 %v907, %v906
        %v920 = vld [vmem:[#allocation8 + $0x40] sm:$0xf]
        %v921 = vld [vmem:[#allocation8 + $0x44] sm:$0xf]
        %v922 = vld [vmem:[#allocation8 + $0x48] sm:$0xf]
        %v923 = vld [vmem:[#allocation8 + $0x4c] sm:$0xf]
        %v924 = vld [vmem:[#allocation8 + $0x50] sm:$0xf]
        %v925 = vld [vmem:[#allocation8 + $0x54] sm:$0xf]
        %v926 = vld [vmem:[#allocation8 + $0x58] sm:$0xf]
        %v927 = vld [vmem:[#allocation8 + $0x5c] sm:$0xf]
        %v928 = vld [vmem:[#allocation8 + $0x60] sm:$0xf]
        %v929 = vld [vmem:[#allocation8 + $0x64] sm:$0xf]
        %v930 = vld [vmem:[#allocation8 + $0x68] sm:$0xf]
        %v931 = vld [vmem:[#allocation8 + $0x6c] sm:$0xf]
        %v932 = vld [vmem:[#allocation8 + $0x70] sm:$0xf]
        %v933 = vld [vmem:[#allocation8 + $0x74] sm:$0xf]
        %v934 = vld [vmem:[#allocation8 + $0x78] sm:$0xf]
        %v935 = vld [vmem:[#allocation8 + $0x7c] sm:$0xf]
        %v952 = vunpack.c.l.b16 %v920
        %v953 = vunpack.c.l.b16 %v921
        %v954 = vunpack.c.l.b16 %v922
        %v955 = vunpack.c.l.b16 %v923
        %v956 = vunpack.c.l.b16 %v924
        %v957 = vunpack.c.l.b16 %v925
        %v958 = vunpack.c.l.b16 %v926
        %v959 = vunpack.c.l.b16 %v927
        %v960 = vunpack.c.l.b16 %v928
        %v961 = vunpack.c.l.b16 %v929
        %v962 = vunpack.c.l.b16 %v930
        %v963 = vunpack.c.l.b16 %v931
        %v964 = vunpack.c.l.b16 %v932
        %v965 = vunpack.c.l.b16 %v933
        %v966 = vunpack.c.l.b16 %v934
        %v967 = vunpack.c.l.b16 %v935
        %v968 = vpack.c.b16 %v953, %v952
        %v969 = vpack.c.b16 %v955, %v954
        %v970 = vpack.c.b16 %v957, %v956
        %v971 = vpack.c.b16 %v959, %v958
        %v972 = vpack.c.b16 %v961, %v960
        %v973 = vpack.c.b16 %v963, %v962
        %v974 = vpack.c.b16 %v965, %v964
        %v975 = vpack.c.b16 %v967, %v966
        %984 = vmatprep.subr.bf16.mxu0 0
        %985 = vmatpush1.bf16.msra.mxu0 %v968
        %986 = vmatprep.subr.bf16.mxu0 0
        %987 = vmatpush1.bf16.msra.mxu0 %v969
        %988 = vmatprep.subr.bf16.mxu0 0
        %989 = vmatpush1.bf16.msra.mxu0 %v970
        %990 = vmatprep.subr.bf16.mxu0 0
        %991 = vmatpush1.bf16.msra.mxu0 %v971
        %992 = vmatprep.subr.bf16.mxu0 0
        %993 = vmatpush1.bf16.msra.mxu0 %v972
        %994 = vmatprep.subr.bf16.mxu0 0
        %995 = vmatpush1.bf16.msra.mxu0 %v973
        %996 = vmatprep.subr.bf16.mxu0 0
        %997 = vmatpush1.bf16.msra.mxu0 %v974
        %998 = vmatprep.subr.bf16.mxu0 0
        %999 = vmatpush1.bf16.msra.mxu0 %v975
        %1000 = vmatprep.subr.bf16.mxu0 0
        %1001 = vmatpush1.bf16.msra.mxu0 0
        %1002 = vmatprep.subr.bf16.mxu0 0
        %1003 = vmatpush1.bf16.msra.mxu0 0
        %1004 = vmatprep.subr.bf16.mxu0 0
        %1005 = vmatpush1.bf16.msra.mxu0 0
        %1006 = vmatprep.subr.bf16.mxu0 0
        %1007 = vmatpush1.bf16.msra.mxu0 0
        %1008 = vmatprep.subr.bf16.mxu0 0
        %1009 = vmatpush1.bf16.msra.mxu0 0
        %1010 = vmatprep.subr.bf16.mxu0 0
        %1011 = vmatpush1.bf16.msra.mxu0 0
        %1012 = vmatprep.subr.bf16.mxu0 0
        %1013 = vmatpush1.bf16.msra.mxu0 0
        %1014 = vmatprep.subr.bf16.mxu0 0
        %1015 = vmatpush1.bf16.msra.mxu0 0
        %1016 = vmatprep.mubr.bf16.mxu0 0
        %1017 = vmatmul.mubr.bf16.gmra.mrb[0].mxu0 %v916
        %v1018 = vpop.f32.mrb[0].mxu0
        %v1019 = vadd.f32 0.0, %v1018
        %v1020 = vpop.f32.mrb[0].mxu0
        %v1021 = vpop.f32.mrb[0].mxu0
        %v1022 = vadd.f32 0.0, %v1021
        %v1023 = vpop.f32.mrb[0].mxu0
        %1024 = vmatprep.mubr.bf16.mxu0 0
        %1025 = vmatmul.mubr.bf16.gmra.mrb[0].mxu0 %v917
        %v1026 = vpop.f32.mrb[0].mxu0
        %v1027 = vadd.f32 0.0, %v1026
        %v1028 = vpop.f32.mrb[0].mxu0
        %v1029 = vpop.f32.mrb[0].mxu0
        %v1030 = vadd.f32 0.0, %v1029
        %v1031 = vpop.f32.mrb[0].mxu0
        %1032 = vmatprep.mubr.bf16.mxu0 0
        %1033 = vmatmul.mubr.bf16.gmra.mrb[0].mxu0 %v918
        %v1034 = vpop.f32.mrb[0].mxu0
        %v1035 = vadd.f32 0.0, %v1034
        %v1036 = vpop.f32.mrb[0].mxu0
        %v1037 = vpop.f32.mrb[0].mxu0
        %v1038 = vadd.f32 0.0, %v1037
        %v1039 = vpop.f32.mrb[0].mxu0
        %1040 = vmatprep.mubr.bf16.mxu0 0
        %1041 = vmatmul.mubr.bf16.gmra.mrb[0].mxu0 %v919
        %v1042 = vpop.f32.mrb[0].mxu0
        %v1043 = vadd.f32 0.0, %v1042
        %v1044 = vpop.f32.mrb[0].mxu0
        %v1045 = vpop.f32.mrb[0].mxu0
        %v1046 = vadd.f32 0.0, %v1045
        %v1047 = vpop.f32.mrb[0].mxu0
        %1048 = vdwg.mxu0
        %v1049 = vadd.f32 %v908, %v1019
        %v1050 = vadd.f32 %v909, %v1022
        %v1051 = vadd.f32 %v910, %v1027
        %v1052 = vadd.f32 %v911, %v1030
        %v1053 = vadd.f32 %v912, %v1035
        %v1054 = vadd.f32 %v913, %v1038
        %v1055 = vadd.f32 %v914, %v1043
        %v1056 = vadd.f32 %v915, %v1046
        %1057 = vst [vmem:[#allocation2] sm:$0xff] %v1049
        %1058 = vst [vmem:[#allocation2 + $0x8] sm:$0xff] %v1050
        %1059 = vst [vmem:[#allocation2 + $0x10] sm:$0xff] %v1051
        %1060 = vst [vmem:[#allocation2 + $0x18] sm:$0xff] %v1052
        %1061 = vst [vmem:[#allocation2 + $0x20] sm:$0xff] %v1053
        %1062 = vst [vmem:[#allocation2 + $0x28] sm:$0xff] %v1054
        %1063 = vst [vmem:[#allocation2 + $0x30] sm:$0xff] %v1055
        %1064 = vst [vmem:[#allocation2 + $0x38] sm:$0xff] %v1056
        %v1065 = vld [vmem:[#allocation2] sm:$0xff]
        %v1066 = vld [vmem:[#allocation2 + $0x8] sm:$0xff]
        %v1067 = vld [vmem:[#allocation2 + $0x10] sm:$0xff]
        %v1068 = vld [vmem:[#allocation2 + $0x18] sm:$0xff]
        %v1069 = vld [vmem:[#allocation2 + $0x20] sm:$0xff]
        %v1070 = vld [vmem:[#allocation2 + $0x28] sm:$0xff]
        %v1071 = vld [vmem:[#allocation2 + $0x30] sm:$0xff]
        %v1072 = vld [vmem:[#allocation2 + $0x38] sm:$0xff]
        %v1073 = vpack.c.bf16 %v1066, %v1065
        %v1074 = vpack.c.bf16 %v1068, %v1067
        %v1075 = vpack.c.bf16 %v1070, %v1069
        %v1076 = vpack.c.bf16 %v1072, %v1071
        %v1081 = vunpack.c.l.b16 %v1073
        %v1082 = vunpack.c.h.b16 %v1073
        %v1083 = vunpack.c.l.b16 %v1074
        %v1084 = vunpack.c.h.b16 %v1074
        %v1085 = vunpack.c.l.b16 %v1075
        %v1086 = vunpack.c.h.b16 %v1075
        %v1087 = vunpack.c.l.b16 %v1076
        %v1088 = vunpack.c.h.b16 %v1076
        %v1089 = vpack.c.b16 %v1081, %v1081
        %v1090 = vpack.c.b16 %v1082, %v1082
        %v1091 = vpack.c.b16 %v1083, %v1083
        %v1092 = vpack.c.b16 %v1084, %v1084
        %v1093 = vpack.c.b16 %v1085, %v1085
        %v1094 = vpack.c.b16 %v1086, %v1086
        %v1095 = vpack.c.b16 %v1087, %v1087
        %v1096 = vpack.c.b16 %v1088, %v1088
        %1105 = vst [vmem:[%s271] sm:$0xf] %v1089
        %1106 = vst [vmem:[%s271 + $0x4] sm:$0xf] %v1090
        %1107 = vst [vmem:[%s271 + $0x8] sm:$0xf] %v1091
        %1108 = vst [vmem:[%s271 + $0xc] sm:$0xf] %v1092
        %1109 = vst [vmem:[%s271 + $0x10] sm:$0xf] %v1093
        %1110 = vst [vmem:[%s271 + $0x14] sm:$0xf] %v1094
        %1111 = vst [vmem:[%s271 + $0x18] sm:$0xf] %v1095
        %1112 = vst [vmem:[%s271 + $0x1c] sm:$0xf] %v1096
        %s1113 = sand.u32 %s141, 1
        %s1114 = scalar_lea.sflag [#allocation5], %s1113
        %s1115 = sand.u32 %s141, 1
        %s1116 = smul.addr %s1115, 32
        %s1117 = scalar_lea.vmem [#allocation9], %s1116
        // Predicated region
        $region53: #{tpu_custom_call.1} parent=39 // pred_check
          %p1118 = pneg %p151
        $region54: #{tpu_custom_call.1} parent=39 // pred_check_branch
          %1120 = sbr.rel (%p1118) target = $region56
        $region55: #{tpu_custom_call.1} parent=39 // pred_region
          %s1121 = smul.u32 8, %s23
          %s1123 = ssub.s32 512, 512
          %1124 = vsyncadd %s1114, %s1123
          %s1125 = smul.addr %s1121, 64
          %s1126 = scalar_lea.hbm %s5, %s1125
          %s1127 = sshll.u32 %s1117, 4
          %s1128 = int_to_ptr.vmem [resolvable:$true] %s1127
          %1133 = dma.vmem_to_hbm [thread:$0]  %s1128, 512, %s1126, %s1114, 64, 64, 4
        $region56: #{tpu_custom_call.1} parent=39 // pred_fallthru
          _
      $region40: #{tpu_custom_call.1} parent=5 // pred_fallthru
        _
      %p1134 = scmp.le.s32.totalorder 2, %s18
      // Predicated region
      $region57: #{tpu_custom_call.1} parent=5 // pred_check
        %p1135 = pneg %p1134
      $region58: #{tpu_custom_call.1} parent=5 // pred_check_branch
        %1137 = sbr.rel (%p1135) target = $region60
      $region59: #{tpu_custom_call.1} parent=5 // pred_region
        %s1138 = ssub.s32 %s18, 2
        // Predicated region
        $region61: #{tpu_custom_call.1} parent=59 // pred_check
          %p1139 = pneg %p157
        $region62: #{tpu_custom_call.1} parent=59 // pred_check_branch
          %1141 = sbr.rel (%p1139) target = $region64
        $region63: #{tpu_custom_call.1} parent=59 // pred_region
          %s1142 = sand.u32 %s142, 1
          %s1143 = scalar_lea.sflag [#allocation5], %s1142
          %s1144 = sand.u32 %s142, 1
          %s1145 = smul.addr %s1144, 32
          %s1146 = scalar_lea.vmem [#allocation9], %s1145
          %1147 = dma.done %s1143, 512
        $region64: #{tpu_custom_call.1} parent=59 // pred_fallthru
          _
      $region60: #{tpu_custom_call.1} parent=5 // pred_fallthru
        _
    $region6: #{tpu_custom_call.1} parent=1 // loop_footer
      %s22 = sadd.s32 1, %s18
    $region7: #{tpu_custom_call.1} parent=1 // loop_footer_branch
      %17 = sbr.rel target = $region3
    $region8: #{tpu_custom_call.1} parent=1 // loop_exit
      _
    %1148 = vsyncpa [#allocation4], 1
    %s1149 = scalar_lea.sflag [#allocation4], 1
    %1150 = vsyncpa %s1149, 1
    %1151 = vsyncpa [#allocation7], 1
    %1152 = vsyncpa [#allocation5], 1
    %s1153 = scalar_lea.sflag [#allocation5], 1
    %1154 = vsyncpa %s1153, 1

</llo_original>
